<compile_context>
chip_gen: v6e
topology: v6e:2x2x1
jax: 0.10.0
libtpu: 0.0.40
codegen_flags: <defaults>
</compile_context>

<pallas_src>
import functools

import jax
import jax.numpy as jnp
from jax import lax
from jax.experimental import pallas as pl
from jax.experimental.pallas import tpu as pltpu


# --------------------------------------------------------------------------- #
# Kernel 1: the whole dilated residual stack in a single pallas_call.
# --------------------------------------------------------------------------- #

def _stack_kernel(dil_ref,                         # scalar prefetch: dilations (SMEM)
                  x_ref, w_in_ref, b_in_ref,       # conv_input (Cin=1, k=1)
                  w_gate_ref, b_gate_ref,          # (3C, 2C): [sigmoid | tanh]
                  w_skip_ref, b_skip_ref,          # 1x1 skip conv
                  w_res_ref, b_res_ref,            # 1x1 residual conv (zeros on last blk)
                  skip_ref,                        # out: leaky_relu(sum of skips)
                  res_pad, skip_acc,               # VMEM scratch, persists across blocks
                  *, B, L, C, Dmax):
    blk = pl.program_id(0)
    nblk = pl.num_programs(0)

    @pl.when(blk == 0)
    def _init():
        res_pad[...] = jnp.zeros_like(res_pad)
        skip_acc[...] = jnp.zeros_like(skip_acc)
        # conv_input: Cin == 1 and k == 1  ->  a pure VPU broadcast, fused here.
        emb = x_ref[...] * w_in_ref[...] + b_in_ref[...]            # (B*L, C)
        res_pad[:, Dmax:Dmax + L, :] = emb.reshape(B, L, C)

    d = dil_ref[blk]

    def tap(start):
        # x[t + (start - Dmax)] with zero 'same' padding; sliced per batch so the
        # dynamic start lands on the well-supported 2-D (sublane, lane) path.
        return jnp.stack(
            [res_pad[b_i, pl.ds(start, L), :] for b_i in range(B)], axis=0)

    xm = tap(Dmax - d)                                              # x[t - d]
    x0 = res_pad[:, Dmax:Dmax + L, :]                               # x[t]
    xp = tap(Dmax + d)                                              # x[t + d]
    xt = jnp.concatenate([xm, x0, xp], axis=-1).reshape(B * L, 3 * C)

    # One lane-dense MXU matmul: K = 3C (tap concat), N = 2C (sigmoid | tanh).
    zg = (jnp.dot(xt, w_gate_ref[0], preferred_element_type=jnp.float32)
          + b_gate_ref[0])                                          # (B*L, 2C)
    gated = jax.nn.sigmoid(zg[:, :C]) * jnp.tanh(zg[:, C:])         # (B*L, C)

    skip = (jnp.dot(gated, w_skip_ref[0], preferred_element_type=jnp.float32)
            + b_skip_ref[0])
    skip_acc[...] += skip

    # Residual path.  w_res / b_res are all-zero for the last (non-residual)
    # block, whose residual output is never consumed.
    res_new = (jnp.dot(gated, w_res_ref[0], preferred_element_type=jnp.float32)
               + b_res_ref[0] + x0.reshape(B * L, C))
    res_pad[:, Dmax:Dmax + L, :] = res_new.reshape(B, L, C)

    @pl.when(blk == nblk - 1)
    def _finish():
        s = skip_acc[...]
        skip_ref[...] = jnp.where(s > 0, s, 0.1 * s).reshape(B, L, C)


def _run_stack(x2d, w_in, b_in, dil, w_gate, b_gate, w_skip, b_skip,
               w_res, b_res, *, B, L, C, Dmax):
    nblk = int(dil.shape[0])
    grid_spec = pltpu.PrefetchScalarGridSpec(
        num_scalar_prefetch=1,
        grid=(nblk,),
        in_specs=[
            pl.BlockSpec((B * L, 1), lambda b, d: (0, 0)),          # x
            pl.BlockSpec((1, C), lambda b, d: (0, 0)),              # w_in
            pl.BlockSpec((1, C), lambda b, d: (0, 0)),              # b_in
            pl.BlockSpec((1, 3 * C, 2 * C), lambda b, d: (b, 0, 0)),  # w_gate
            pl.BlockSpec((1, 1, 2 * C), lambda b, d: (b, 0, 0)),      # b_gate
            pl.BlockSpec((1, C, C), lambda b, d: (b, 0, 0)),          # w_skip
            pl.BlockSpec((1, 1, C), lambda b, d: (b, 0, 0)),          # b_skip
            pl.BlockSpec((1, C, C), lambda b, d: (b, 0, 0)),          # w_res
            pl.BlockSpec((1, 1, C), lambda b, d: (b, 0, 0)),          # b_res
        ],
        out_specs=pl.BlockSpec((B, L, C), lambda b, d: (0, 0, 0)),
        scratch_shapes=[
            pltpu.VMEM((B, L + 2 * Dmax, C), jnp.float32),   # zero-padded residual
            pltpu.VMEM((B * L, C), jnp.float32),             # skip-sum accumulator
        ],
    )
    return pl.pallas_call(
        functools.partial(_stack_kernel, B=B, L=L, C=C, Dmax=Dmax),
        grid_spec=grid_spec,
        out_shape=jax.ShapeDtypeStruct((B, L, C), jnp.float32),
        compiler_params=pltpu.CompilerParams(
            dimension_semantics=("arbitrary",)),
    )(dil, x2d, w_in, b_in, w_gate, b_gate, w_skip, b_skip, w_res, b_res)


# --------------------------------------------------------------------------- #
# Kernel 2: conv_output1 (k=3, C -> 2048) + leaky_relu, tiled over output cols.
# --------------------------------------------------------------------------- #

def _out1_kernel(skip_ref, w1_ref, b1_ref, h1_ref, sbuf, *, B, L, C):
    # Zero-padded copy of skip_sum for the +-1 taps of the k=3 'same' conv.
    sbuf[:, 1:L + 1, :] = skip_ref[...]
    sbuf[:, 0:1, :] = jnp.zeros((B, 1, C), jnp.float32)
    sbuf[:, L + 1:L + 2, :] = jnp.zeros((B, 1, C), jnp.float32)
    xt = jnp.concatenate(
        [sbuf[:, 0:L, :], sbuf[:, 1:L + 1, :], sbuf[:, 2:L + 2, :]],
        axis=-1).reshape(B * L, 3 * C)
    h = (jnp.dot(xt.astype(jnp.bfloat16), w1_ref[...],
                 preferred_element_type=jnp.float32) + b1_ref[...])
    h = jnp.where(h > 0, h, 0.1 * h)                                # leaky_relu(0.1)
    h1_ref[...] = h.reshape(B, L, -1).astype(h1_ref.dtype)


def _run_out1(skip, w1, b1, *, B, L, C, tn=512):
    n_out = int(w1.shape[1])
    assert n_out % tn == 0
    return pl.pallas_call(
        functools.partial(_out1_kernel, B=B, L=L, C=C),
        grid=(n_out // tn,),
        in_specs=[
            pl.BlockSpec((B, L, C), lambda j: (0, 0, 0)),
            pl.BlockSpec((3 * C, tn), lambda j: (0, j)),
            pl.BlockSpec((1, tn), lambda j: (0, j)),
        ],
        out_specs=pl.BlockSpec((B, L, tn), lambda j: (0, 0, j)),
        out_shape=jax.ShapeDtypeStruct((B, L, n_out), jnp.bfloat16),
        scratch_shapes=[pltpu.VMEM((B, L + 2, C), jnp.float32)],
        compiler_params=pltpu.CompilerParams(
            dimension_semantics=("parallel",)),
    )(skip, w1, b1)


# --------------------------------------------------------------------------- #
# Kernel 3: conv_output2 (k=3, 2048 -> 256) + leaky_relu, fused with
#           conv_output3 (k=1, 256 -> 1) + tanh.  Grid over input channels.
# --------------------------------------------------------------------------- #

def _out2_kernel(h1_ref, w2_ref, b2_ref, w3_ref, b3_ref, o_ref, xbuf, acc,
                 *, B, L):
    k = pl.program_id(0)
    tk = h1_ref.shape[-1]

    @pl.when(k == 0)
    def _init():
        acc[...] = jnp.zeros_like(acc)

    # Zero-padded f32 copy of this channel tile of h1 for the +-1 taps.
    xbuf[:, 1:L + 1, :] = h1_ref[...].astype(jnp.float32)
    xbuf[:, 0:1, :] = jnp.zeros((B, 1, tk), jnp.float32)
    xbuf[:, L + 1:L + 2, :] = jnp.zeros((B, 1, tk), jnp.float32)
    xt = jnp.concatenate(
        [xbuf[:, 0:L, :], xbuf[:, 1:L + 1, :], xbuf[:, 2:L + 2, :]],
        axis=-1).reshape(B * L, 3 * tk)
    w2 = w2_ref[...].reshape(3 * tk, -1)
    acc[...] += jnp.dot(xt.astype(jnp.bfloat16), w2,
                        preferred_element_type=jnp.float32)

    @pl.when(k == pl.num_programs(0) - 1)
    def _finish():
        h2 = acc[...] + b2_ref[...]
        h2 = jnp.where(h2 > 0, h2, 0.1 * h2)                        # leaky_relu(0.1)
        y = (jnp.dot(h2, w3_ref[...], preferred_element_type=jnp.float32)
             + b3_ref[...])
        o_ref[...] = jnp.tanh(y)                                    # (B*L, 1)


def _run_out23(h1, w2, b2, w3, b3, *, B, L, tk=512):
    c_in = int(h1.shape[-1])
    c_mid = int(w2.shape[-1])
    assert c_in % tk == 0
    return pl.pallas_call(
        functools.partial(_out2_kernel, B=B, L=L),
        grid=(c_in // tk,),
        in_specs=[
            pl.BlockSpec((B, L, tk), lambda k: (0, 0, k)),
            pl.BlockSpec((3, tk, c_mid), lambda k: (0, k, 0)),
            pl.BlockSpec((1, c_mid), lambda k: (0, 0)),
            pl.BlockSpec((c_mid, 1), lambda k: (0, 0)),
            pl.BlockSpec((1, 1), lambda k: (0, 0)),
        ],
        out_specs=pl.BlockSpec((B * L, 1), lambda k: (0, 0)),
        out_shape=jax.ShapeDtypeStruct((B * L, 1), jnp.float32),
        scratch_shapes=[pltpu.VMEM((B, L + 2, tk), jnp.float32),
                        pltpu.VMEM((B * L, c_mid), jnp.float32)],
        compiler_params=pltpu.CompilerParams(
            dimension_semantics=("arbitrary",)),
    )(h1, w2, b2, w3, b3)


# --------------------------------- forward --------------------------------- #

def wavenet_forward(params, x_ncl):
    """Pallas Wavenet forward.  x_ncl: (B, 1, L) float32 -> (B, 1, L) float32."""
    B, _, L = x_ncl.shape
    C = int(params["b_in"].shape[0])
    blocks = params["blocks"]
    Dmax = max(int(blk["dilation"]) for blk in blocks)
    assert L % 8 == 0, "sequence length must be sublane-aligned (multiple of 8)"
    assert C % 128 == 0, "channel width must be lane-aligned (multiple of 128)"

    dil = jnp.asarray([blk["dilation"] for blk in blocks], jnp.int32)

    # ---- weight prep (pure layout, plain XLA) ------------------------------ #
    w_in = params["w_in"].reshape(1, C)
    b_in = params["b_in"].reshape(1, C)
    w_gate = jnp.stack([
        jnp.concatenate([blk["w_s"].reshape(3 * C, C),
                         blk["w_t"].reshape(3 * C, C)], axis=1)
        for blk in blocks])                                        # (nblk, 3C, 2C)
    b_gate = jnp.stack([
        jnp.concatenate([blk["b_s"], blk["b_t"]])[None, :] for blk in blocks])
    w_skip = jnp.stack([blk["w_skip"][0] for blk in blocks])       # (nblk, C, C)
    b_skip = jnp.stack([blk["b_skip"][None, :] for blk in blocks])
    zero_cc = jnp.zeros((C, C), jnp.float32)
    zero_c = jnp.zeros((1, C), jnp.float32)
    w_res = jnp.stack([blk["w_res"][0] if blk["residual"] else zero_cc
                       for blk in blocks])
    b_res = jnp.stack([blk["b_res"][None, :] if blk["residual"] else zero_c
                       for blk in blocks])

    w1 = params["w_out1"].reshape(3 * C, -1).astype(jnp.bfloat16)  # (3C, 2048)
    b1 = params["b_out1"][None, :]
    w2 = params["w_out2"].astype(jnp.bfloat16)                     # (3, 2048, 256)
    b2 = params["b_out2"][None, :]
    w3 = params["w_out3"][0]                                       # (256, 1)
    b3 = params["b_out3"].reshape(1, 1)

    x2d = jnp.transpose(x_ncl, (0, 2, 1)).reshape(B * L, 1)

    # ---- fused kernels ------------------------------------------------------ #
    skip = _run_stack(x2d, w_in, b_in, dil, w_gate, b_gate,
                      w_skip, b_skip, w_res, b_res, B=B, L=L, C=C, Dmax=Dmax)
    h1 = _run_out1(skip, w1, b1, B=B, L=L, C=C)
    y = _run_out23(h1, w2, b2, w3, b3, B=B, L=L)
    return jnp.transpose(y.reshape(B, L, 1), (0, 2, 1))            # (B, 1, L)


# --------------------------- plain-JAX reference ---------------------------- #

def _conv1d_ref(x_ncl, w_kio, b, dilation=1):
    w = jnp.transpose(w_kio, (2, 1, 0))                    # (Cout, Cin, K)
    k = w.shape[-1]
    pad = dilation * (k - 1) // 2
    y = lax.conv_general_dilated(x_ncl, w, window_strides=(1,),
                                 padding=[(pad, pad)], rhs_dilation=(dilation,),
                                 dimension_numbers=("NCH", "OIH", "NCH"))
    return y + b[None, :, None]


def wavenet_ref(params, x):
    res = _conv1d_ref(x, params["w_in"], params["b_in"])
    skip_sum = None
    for blk in params["blocks"]:
        d = blk["dilation"]
        g = (jax.nn.sigmoid(_conv1d_ref(res, blk["w_s"], blk["b_s"], d))
             * jnp.tanh(_conv1d_ref(res, blk["w_t"], blk["b_t"], d)))
        skip = _conv1d_ref(g, blk["w_skip"], blk["b_skip"])
        if blk["residual"]:
            res = _conv1d_ref(g, blk["w_res"], blk["b_res"]) + res
        else:
            res = skip
        skip_sum = skip if skip_sum is None else skip_sum + skip
    skip_sum = jax.nn.leaky_relu(skip_sum, 0.1)
    o = jax.nn.leaky_relu(_conv1d_ref(skip_sum, params["w_out1"], params["b_out1"]), 0.1)
    o = jax.nn.leaky_relu(_conv1d_ref(o, params["w_out2"], params["b_out2"]), 0.1)
    return jnp.tanh(_conv1d_ref(o, params["w_out3"], params["b_out3"]))


# --------------------------------- params ----------------------------------- #

def init_params(key, dilations, channel=128, c_out1=2048, c_out2=256):
    keys = iter(jax.random.split(key, 4 * len(dilations) + 8))

    def w(shape):  # deterministic xavier-style uniform, (K, Cin, Cout)
        k, cin, cout = shape
        s = (6.0 / (k * cin + k * cout)) ** 0.5
        return jax.random.uniform(next(keys), shape, jnp.float32, -s, s)

    zeros = lambda n: jnp.zeros((n,), jnp.float32)
    params = {"w_in": w((1, 1, channel)), "b_in": zeros(channel)}
    blocks = []
    for i, d in enumerate(dilations):
        residual = i < len(dilations) - 1
        blk = {"dilation": int(d), "residual": residual,
               "w_s": w((3, channel, channel)), "b_s": zeros(channel),
               "w_t": w((3, channel, channel)), "b_t": zeros(channel),
               "w_skip": w((1, channel, channel)), "b_skip": zeros(channel)}
        if residual:
            blk["w_res"] = w((1, channel, channel))
            blk["b_res"] = zeros(channel)
        blocks.append(blk)
    params["blocks"] = blocks
    params["w_out1"] = w((3, channel, c_out1)); params["b_out1"] = zeros(c_out1)
    params["w_out2"] = w((3, c_out1, c_out2)); params["b_out2"] = zeros(c_out2)
    params["w_out3"] = w((1, c_out2, 1));      params["b_out3"] = zeros(1)
    return params


# ---------------------------------- main ------------------------------------ #

if __name__ == "__main__":
    key = jax.random.PRNGKey(0)
    kp, kx = jax.random.split(key)

    B, L = 2, 64
    dilations = (1, 2, 4)
    channel = 128   # PyTorch default Wavenet channel width; heads fixed 2048/256/1

    params = init_params(kp, dilations, channel=channel)
    x = jax.random.normal(kx, (B, 1, L), jnp.float32)   # NCL, like the PyTorch input

    out = jax.block_until_ready(wavenet_forward(params, x))
    ref = jax.block_until_ready(wavenet_ref(params, x))

    err = float(jnp.max(jnp.abs(out - ref)))
    assert out.shape == (B, 1, L), out.shape
    # The output head runs its MXU matmuls with bf16 operands (f32 accumulation),
    # so the tolerance is looser than a pure-f32 pipeline (observed err ~1e-3 scale).
    assert err < 2e-2, f"max abs diff vs reference: {err}"

    print("KERNEL_OK")
</pallas_src>

<mosaic_0001>
module attributes {stable_mosaic.version = 11 : i64} {
  func.func @_stack_kernel(%arg0: i32, %arg1: memref<3xi32, #tpu.memory_space<smem>>, %arg2: memref<128x1xf32, #tpu.memory_space<vmem>>, %arg3: memref<1x128xf32, #tpu.memory_space<vmem>>, %arg4: memref<1x128xf32, #tpu.memory_space<vmem>>, %arg5: memref<1x384x256xf32, #tpu.memory_space<vmem>>, %arg6: memref<1x1x256xf32, #tpu.memory_space<vmem>>, %arg7: memref<1x128x128xf32, #tpu.memory_space<vmem>>, %arg8: memref<1x1x128xf32, #tpu.memory_space<vmem>>, %arg9: memref<1x128x128xf32, #tpu.memory_space<vmem>>, %arg10: memref<1x1x128xf32, #tpu.memory_space<vmem>>, %arg11: memref<2x64x128xf32, #tpu.memory_space<vmem>>, %arg12: memref<2x72x128xf32, #tpu.memory_space<vmem>>, %arg13: memref<128x128xf32, #tpu.memory_space<vmem>>) attributes {dimension_semantics = [#tpu.dimension_semantics<arbitrary>], iteration_bounds = array<i64: 3>, scalar_prefetch = 1 : i64, scratch_operands = 2 : i64, tpu.core_type = #tpu.core_type<tc>, window_params = [{pipeline_mode = #tpu.pipeline_mode<synchronous>, transform_indices = @transform_0, window_bounds = array<i64: 128, 1>}, {pipeline_mode = #tpu.pipeline_mode<synchronous>, transform_indices = @transform_1, window_bounds = array<i64: 1, 128>}, {pipeline_mode = #tpu.pipeline_mode<synchronous>, transform_indices = @transform_2, window_bounds = array<i64: 1, 128>}, {transform_indices = @transform_3, window_bounds = array<i64: 1, 384, 256>}, {transform_indices = @transform_4, window_bounds = array<i64: 1, 1, 256>}, {transform_indices = @transform_5, window_bounds = array<i64: 1, 128, 128>}, {transform_indices = @transform_6, window_bounds = array<i64: 1, 1, 128>}, {transform_indices = @transform_7, window_bounds = array<i64: 1, 128, 128>}, {transform_indices = @transform_8, window_bounds = array<i64: 1, 1, 128>}, {pipeline_mode = #tpu.pipeline_mode<synchronous>, transform_indices = @transform_9, window_bounds = array<i64: 2, 64, 128>}]} {
    %c0_i32 = arith.constant 0 : i32
    %0 = arith.cmpi eq, %arg0, %c0_i32 : i32
    %1 = arith.extui %0 : i1 to i32
    %c0_i32_0 = arith.constant 0 : i32
    %2 = arith.cmpi ne, %1, %c0_i32_0 : i32
    scf.if %2 {
      %cst_39 = arith.constant 0.000000e+00 : f32
      %68 = vector.broadcast %cst_39 : f32 to vector<2x72x128xf32>
      %c0_40 = arith.constant 0 : index
      %c0_41 = arith.constant 0 : index
      %c0_42 = arith.constant 0 : index
      %69 = vector.load %arg12[%c0_40, %c0_41, %c0_42] : memref<2x72x128xf32, #tpu.memory_space<vmem>>, vector<2x72x128xf32>
      tpu.vector_store %arg12[%c0_40, %c0_41, %c0_42], %68 {strides = array<i32>} : memref<2x72x128xf32, #tpu.memory_space<vmem>>, vector<2x72x128xf32>,
      %cst_43 = arith.constant 0.000000e+00 : f32
      %70 = vector.broadcast %cst_43 : f32 to vector<128x128xf32>
      %c0_44 = arith.constant 0 : index
      %c0_45 = arith.constant 0 : index
      %71 = vector.load %arg13[%c0_44, %c0_45] : memref<128x128xf32, #tpu.memory_space<vmem>>, vector<128x128xf32>
      tpu.vector_store %arg13[%c0_44, %c0_45], %70 {strides = array<i32>} : memref<128x128xf32, #tpu.memory_space<vmem>>, vector<128x128xf32>,
      %c0_46 = arith.constant 0 : index
      %c0_47 = arith.constant 0 : index
      %72 = vector.load %arg2[%c0_46, %c0_47] : memref<128x1xf32, #tpu.memory_space<vmem>>, vector<128x1xf32>
      %c0_48 = arith.constant 0 : index
      %c0_49 = arith.constant 0 : index
      %73 = vector.load %arg3[%c0_48, %c0_49] : memref<1x128xf32, #tpu.memory_space<vmem>>, vector<1x128xf32>
      %74 = vector.broadcast %72 : vector<128x1xf32> to vector<128x128xf32>
      %75 = vector.broadcast %73 : vector<1x128xf32> to vector<128x128xf32>
      %76 = arith.mulf %74, %75 : vector<128x128xf32>
      %c0_50 = arith.constant 0 : index
      %c0_51 = arith.constant 0 : index
      %77 = vector.load %arg4[%c0_50, %c0_51] : memref<1x128xf32, #tpu.memory_space<vmem>>, vector<1x128xf32>
      %78 = vector.broadcast %77 : vector<1x128xf32> to vector<128x128xf32>
      %79 = arith.addf %76, %78 : vector<128x128xf32>
      %80 = vector.shape_cast %79 : vector<128x128xf32> to vector<2x64x128xf32>
      %c0_52 = arith.constant 0 : index
      %c4_53 = arith.constant 4 : index
      %c0_54 = arith.constant 0 : index
      %81 = vector.load %arg12[%c0_52, %c4_53, %c0_54] : memref<2x72x128xf32, #tpu.memory_space<vmem>>, vector<2x64x128xf32>
      tpu.vector_store %arg12[%c0_52, %c4_53, %c0_54], %80 {strides = array<i32>} : memref<2x72x128xf32, #tpu.memory_space<vmem>>, vector<2x64x128xf32>,
    } else {
    }
    %3 = arith.index_cast %arg0 : i32 to index
    %4 = memref.load %arg1[%3] : memref<3xi32, #tpu.memory_space<smem>>
    %c4_i32 = arith.constant 4 : i32
    %5 = arith.subi %c4_i32, %4 : i32
    %c0 = arith.constant 0 : index
    %6 = arith.index_cast %5 : i32 to index
    %c0_1 = arith.constant 0 : index
    %7 = vector.load %arg12[%c0, %6, %c0_1] : memref<2x72x128xf32, #tpu.memory_space<vmem>>, vector<1x64x128xf32>
    %8 = vector.shape_cast %7 : vector<1x64x128xf32> to vector<64x128xf32>
    %c1 = arith.constant 1 : index
    %9 = arith.index_cast %5 : i32 to index
    %c0_2 = arith.constant 0 : index
    %10 = vector.load %arg12[%c1, %9, %c0_2] : memref<2x72x128xf32, #tpu.memory_space<vmem>>, vector<1x64x128xf32>
    %11 = vector.shape_cast %10 : vector<1x64x128xf32> to vector<64x128xf32>
    %12 = vector.shape_cast %8 : vector<64x128xf32> to vector<1x64x128xf32>
    %13 = vector.shape_cast %11 : vector<64x128xf32> to vector<1x64x128xf32>
    %14 = tpu.concatenate %12, %13 in 0 : vector<1x64x128xf32>, vector<1x64x128xf32> -> vector<2x64x128xf32>
    %c0_3 = arith.constant 0 : index
    %c4 = arith.constant 4 : index
    %c0_4 = arith.constant 0 : index
    %15 = vector.load %arg12[%c0_3, %c4, %c0_4] : memref<2x72x128xf32, #tpu.memory_space<vmem>>, vector<2x64x128xf32>
    %c4_i32_5 = arith.constant 4 : i32
    %16 = arith.addi %c4_i32_5, %4 : i32
    %c0_6 = arith.constant 0 : index
    %17 = arith.index_cast %16 : i32 to index
    %c0_7 = arith.constant 0 : index
    %18 = vector.load %arg12[%c0_6, %17, %c0_7] : memref<2x72x128xf32, #tpu.memory_space<vmem>>, vector<1x64x128xf32>
    %19 = vector.shape_cast %18 : vector<1x64x128xf32> to vector<64x128xf32>
    %c1_8 = arith.constant 1 : index
    %20 = arith.index_cast %16 : i32 to index
    %c0_9 = arith.constant 0 : index
    %21 = vector.load %arg12[%c1_8, %20, %c0_9] : memref<2x72x128xf32, #tpu.memory_space<vmem>>, vector<1x64x128xf32>
    %22 = vector.shape_cast %21 : vector<1x64x128xf32> to vector<64x128xf32>
    %23 = vector.shape_cast %19 : vector<64x128xf32> to vector<1x64x128xf32>
    %24 = vector.shape_cast %22 : vector<64x128xf32> to vector<1x64x128xf32>
    %25 = tpu.concatenate %23, %24 in 0 : vector<1x64x128xf32>, vector<1x64x128xf32> -> vector<2x64x128xf32>
    %26 = tpu.concatenate %14, %15, %25 in 2 : vector<2x64x128xf32>, vector<2x64x128xf32>, vector<2x64x128xf32> -> vector<2x64x384xf32>
    %27 = vector.shape_cast %26 : vector<2x64x384xf32> to vector<128x384xf32>
    %c0_10 = arith.constant 0 : index
    %c0_11 = arith.constant 0 : index
    %c0_12 = arith.constant 0 : index
    %28 = vector.load %arg5[%c0_10, %c0_11, %c0_12] : memref<1x384x256xf32, #tpu.memory_space<vmem>>, vector<1x384x256xf32>
    %29 = vector.shape_cast %28 : vector<1x384x256xf32> to vector<384x256xf32>
    %cst = arith.constant dense<0.000000e+00> : vector<128x256xf32>
    %30 = tpu.matmul %27, %29, %cst {dimension_numbers = #tpu.dot_dimension_numbers<[1], [0], [0], [1], [0, 0, 1, 1], [], []>} : vector<128x384xf32>, vector<384x256xf32>, vector<128x256xf32> -> vector<128x256xf32>
    %c0_13 = arith.constant 0 : index
    %c0_14 = arith.constant 0 : index
    %c0_15 = arith.constant 0 : index
    %31 = vector.load %arg6[%c0_13, %c0_14, %c0_15] : memref<1x1x256xf32, #tpu.memory_space<vmem>>, vector<1x1x256xf32>
    %32 = vector.shape_cast %31 : vector<1x1x256xf32> to vector<1x256xf32>
    %33 = vector.broadcast %32 : vector<1x256xf32> to vector<128x256xf32>
    %34 = arith.addf %30, %33 : vector<128x256xf32>
    %35 = vector.extract_strided_slice %34 {offsets = [0, 0], sizes = [128, 128], strides = [1, 1]} : vector<128x256xf32> to vector<128x128xf32>
    %36 = arith.negf %35 : vector<128x128xf32>
    %37 = math.exp %36 : vector<128x128xf32>
    %cst_16 = arith.constant 1.000000e+00 : f32
    %38 = vector.broadcast %cst_16 : f32 to vector<128x128xf32>
    %39 = arith.addf %38, %37 : vector<128x128xf32>
    %40 = arith.divf %38, %39 : vector<128x128xf32>
    %41 = vector.extract_strided_slice %34 {offsets = [0, 128], sizes = [128, 128], strides = [1, 1]} : vector<128x256xf32> to vector<128x128xf32>
    %42 = math.tanh %41 : vector<128x128xf32>
    %43 = arith.mulf %40, %42 : vector<128x128xf32>
    %c0_17 = arith.constant 0 : index
    %c0_18 = arith.constant 0 : index
    %c0_19 = arith.constant 0 : index
    %44 = vector.load %arg7[%c0_17, %c0_18, %c0_19] : memref<1x128x128xf32, #tpu.memory_space<vmem>>, vector<1x128x128xf32>
    %45 = vector.shape_cast %44 : vector<1x128x128xf32> to vector<128x128xf32>
    %cst_20 = arith.constant dense<0.000000e+00> : vector<128x128xf32>
    %46 = tpu.matmul %43, %45, %cst_20 {dimension_numbers = #tpu.dot_dimension_numbers<[1], [0], [0], [1], [0, 0, 1, 1], [], []>} : vector<128x128xf32>, vector<128x128xf32>, vector<128x128xf32> -> vector<128x128xf32>
    %c0_21 = arith.constant 0 : index
    %c0_22 = arith.constant 0 : index
    %c0_23 = arith.constant 0 : index
    %47 = vector.load %arg8[%c0_21, %c0_22, %c0_23] : memref<1x1x128xf32, #tpu.memory_space<vmem>>, vector<1x1x128xf32>
    %48 = vector.shape_cast %47 : vector<1x1x128xf32> to vector<1x128xf32>
    %49 = vector.broadcast %48 : vector<1x128xf32> to vector<128x128xf32>
    %50 = arith.addf %46, %49 : vector<128x128xf32>
    %c0_24 = arith.constant 0 : index
    %c0_25 = arith.constant 0 : index
    %51 = vector.load %arg13[%c0_24, %c0_25] : memref<128x128xf32, #tpu.memory_space<vmem>>, vector<128x128xf32>
    %52 = arith.addf %51, %50 : vector<128x128xf32>
    %c0_26 = arith.constant 0 : index
    %c0_27 = arith.constant 0 : index
    %53 = vector.load %arg13[%c0_26, %c0_27] : memref<128x128xf32, #tpu.memory_space<vmem>>, vector<128x128xf32>
    tpu.vector_store %arg13[%c0_26, %c0_27], %52 {strides = array<i32>} : memref<128x128xf32, #tpu.memory_space<vmem>>, vector<128x128xf32>,
    %c0_28 = arith.constant 0 : index
    %c0_29 = arith.constant 0 : index
    %c0_30 = arith.constant 0 : index
    %54 = vector.load %arg9[%c0_28, %c0_29, %c0_30] : memref<1x128x128xf32, #tpu.memory_space<vmem>>, vector<1x128x128xf32>
    %55 = vector.shape_cast %54 : vector<1x128x128xf32> to vector<128x128xf32>
    %cst_31 = arith.constant dense<0.000000e+00> : vector<128x128xf32>
    %56 = tpu.matmul %43, %55, %cst_31 {dimension_numbers = #tpu.dot_dimension_numbers<[1], [0], [0], [1], [0, 0, 1, 1], [], []>} : vector<128x128xf32>, vector<128x128xf32>, vector<128x128xf32> -> vector<128x128xf32>
    %c0_32 = arith.constant 0 : index
    %c0_33 = arith.constant 0 : index
    %c0_34 = arith.constant 0 : index
    %57 = vector.load %arg10[%c0_32, %c0_33, %c0_34] : memref<1x1x128xf32, #tpu.memory_space<vmem>>, vector<1x1x128xf32>
    %58 = vector.shape_cast %57 : vector<1x1x128xf32> to vector<1x128xf32>
    %59 = vector.broadcast %58 : vector<1x128xf32> to vector<128x128xf32>
    %60 = arith.addf %56, %59 : vector<128x128xf32>
    %61 = vector.shape_cast %15 : vector<2x64x128xf32> to vector<128x128xf32>
    %62 = arith.addf %60, %61 : vector<128x128xf32>
    %63 = vector.shape_cast %62 : vector<128x128xf32> to vector<2x64x128xf32>
    %c0_35 = arith.constant 0 : index
    %c4_36 = arith.constant 4 : index
    %c0_37 = arith.constant 0 : index
    %64 = vector.load %arg12[%c0_35, %c4_36, %c0_37] : memref<2x72x128xf32, #tpu.memory_space<vmem>>, vector<2x64x128xf32>
    tpu.vector_store %arg12[%c0_35, %c4_36, %c0_37], %63 {strides = array<i32>} : memref<2x72x128xf32, #tpu.memory_space<vmem>>, vector<2x64x128xf32>,
    %c2_i32 = arith.constant 2 : i32
    %65 = arith.cmpi eq, %arg0, %c2_i32 : i32
    %66 = arith.extui %65 : i1 to i32
    %c0_i32_38 = arith.constant 0 : i32
    %67 = arith.cmpi ne, %66, %c0_i32_38 : i32
    scf.if %67 {
      %c0_39 = arith.constant 0 : index
      %c0_40 = arith.constant 0 : index
      %68 = vector.load %arg13[%c0_39, %c0_40] : memref<128x128xf32, #tpu.memory_space<vmem>>, vector<128x128xf32>
      %cst_41 = arith.constant 0.000000e+00 : f32
      %69 = vector.broadcast %cst_41 : f32 to vector<128x128xf32>
      %70 = arith.cmpf ogt, %68, %69 : vector<128x128xf32>
      %cst_42 = arith.constant 1.000000e-01 : f32
      %71 = vector.broadcast %cst_42 : f32 to vector<128x128xf32>
      %72 = arith.mulf %71, %68 : vector<128x128xf32>
      %73 = arith.select %70, %68, %72 : vector<128x128xi1>, vector<128x128xf32>
      %74 = vector.shape_cast %73 : vector<128x128xf32> to vector<2x64x128xf32>
      %c0_43 = arith.constant 0 : index
      %c0_44 = arith.constant 0 : index
      %c0_45 = arith.constant 0 : index
      %75 = vector.load %arg11[%c0_43, %c0_44, %c0_45] : memref<2x64x128xf32, #tpu.memory_space<vmem>>, vector<2x64x128xf32>
      tpu.vector_store %arg11[%c0_43, %c0_44, %c0_45], %74 {strides = array<i32>} : memref<2x64x128xf32, #tpu.memory_space<vmem>>, vector<2x64x128xf32>,
    } else {
    }
    return
  }
  func.func @transform_0(%arg0: i32, %arg1: memref<3xi32, #tpu.memory_space<smem>>) -> (i32, i32) {
    %c0_i32 = arith.constant 0 : i32
    %c0_i32_0 = arith.constant 0 : i32
    %c0_i32_1 = arith.constant 0 : i32
    return %c0_i32, %c0_i32_0 : i32, i32
  }
  func.func @transform_1(%arg0: i32, %arg1: memref<3xi32, #tpu.memory_space<smem>>) -> (i32, i32) {
    %c0_i32 = arith.constant 0 : i32
    %c0_i32_0 = arith.constant 0 : i32
    %c0_i32_1 = arith.constant 0 : i32
    return %c0_i32, %c0_i32_0 : i32, i32
  }
  func.func @transform_2(%arg0: i32, %arg1: memref<3xi32, #tpu.memory_space<smem>>) -> (i32, i32) {
    %c0_i32 = arith.constant 0 : i32
    %c0_i32_0 = arith.constant 0 : i32
    %c0_i32_1 = arith.constant 0 : i32
    return %c0_i32, %c0_i32_0 : i32, i32
  }
  func.func @transform_3(%arg0: i32, %arg1: memref<3xi32, #tpu.memory_space<smem>>) -> (i32, i32, i32) {
    %c0_i32 = arith.constant 0 : i32
    %c0_i32_0 = arith.constant 0 : i32
    %c0_i32_1 = arith.constant 0 : i32
    return %arg0, %c0_i32, %c0_i32_0 : i32, i32, i32
  }
  func.func @transform_4(%arg0: i32, %arg1: memref<3xi32, #tpu.memory_space<smem>>) -> (i32, i32, i32) {
    %c0_i32 = arith.constant 0 : i32
    %c0_i32_0 = arith.constant 0 : i32
    %c0_i32_1 = arith.constant 0 : i32
    return %arg0, %c0_i32, %c0_i32_0 : i32, i32, i32
  }
  func.func @transform_5(%arg0: i32, %arg1: memref<3xi32, #tpu.memory_space<smem>>) -> (i32, i32, i32) {
    %c0_i32 = arith.constant 0 : i32
    %c0_i32_0 = arith.constant 0 : i32
    %c0_i32_1 = arith.constant 0 : i32
    return %arg0, %c0_i32, %c0_i32_0 : i32, i32, i32
  }
  func.func @transform_6(%arg0: i32, %arg1: memref<3xi32, #tpu.memory_space<smem>>) -> (i32, i32, i32) {
    %c0_i32 = arith.constant 0 : i32
    %c0_i32_0 = arith.constant 0 : i32
    %c0_i32_1 = arith.constant 0 : i32
    return %arg0, %c0_i32, %c0_i32_0 : i32, i32, i32
  }
  func.func @transform_7(%arg0: i32, %arg1: memref<3xi32, #tpu.memory_space<smem>>) -> (i32, i32, i32) {
    %c0_i32 = arith.constant 0 : i32
    %c0_i32_0 = arith.constant 0 : i32
    %c0_i32_1 = arith.constant 0 : i32
    return %arg0, %c0_i32, %c0_i32_0 : i32, i32, i32
  }
  func.func @transform_8(%arg0: i32, %arg1: memref<3xi32, #tpu.memory_space<smem>>) -> (i32, i32, i32) {
    %c0_i32 = arith.constant 0 : i32
    %c0_i32_0 = arith.constant 0 : i32
    %c0_i32_1 = arith.constant 0 : i32
    return %arg0, %c0_i32, %c0_i32_0 : i32, i32, i32
  }
  func.func @transform_9(%arg0: i32, %arg1: memref<3xi32, #tpu.memory_space<smem>>) -> (i32, i32, i32) {
    %c0_i32 = arith.constant 0 : i32
    %c0_i32_0 = arith.constant 0 : i32
    %c0_i32_1 = arith.constant 0 : i32
    %c0_i32_2 = arith.constant 0 : i32
    return %c0_i32, %c0_i32_0, %c0_i32_1 : i32, i32, i32
  }
}

</mosaic_0001>

<llo_original>
// kernel: tpu_custom_call.1
$region0: #{tpu_custom_call.1}
  #allocation0 [shape = 'u32[]', space=smem, size = 0x4, offset = 0x4, fixed_abs, tag = 'smem constant byte address 0x4 - core index']
  #allocation1 [shape = 'u32[144,128]{1,0:T(1,128)}', space=vmem, size = 0x12000, scoped, tag = 'internal scratch']
  #allocation2 [shape = 'f32[2,72,128]{2,1,0:T(8,128)}', space=vmem, size = 0x12000, scoped, tag = 'scratch operand']
  #allocation3 [shape = 'f32[128,128]{1,0:T(8,128)}', space=vmem, size = 0x10000, scoped, tag = 'scratch operand']
  #allocation4 [shape = 's32[1]{0}', space=sflag, size = 0x4, scoped, tag = 'scoped memory for tpu_custom_call.1']
  #allocation5 [shape = 'u8[512]{0}', space=smem, size = 0x200, scoped, tag = 'prefetched SMEM operand 0']
  %s0 = inlined_call_operand.hbm [shape: s32[3], index: 0, kind: input, shape index: {}]
  %s1 = inlined_call_operand.vmem [shape: f32[128,1], index: 1, kind: input, shape index: {}]
  %s2 = inlined_call_operand.hbm [shape: f32[1,128], index: 2, kind: input, shape index: {}]
  %s3 = inlined_call_operand.hbm [shape: f32[1,128], index: 3, kind: input, shape index: {}]
  %s4 = inlined_call_operand.hbm [shape: f32[3,384,256], index: 4, kind: input, shape index: {}]
  %s5 = inlined_call_operand.hbm [shape: f32[3,1,256], index: 5, kind: input, shape index: {}]
  %s6 = inlined_call_operand.hbm [shape: f32[3,128,128], index: 6, kind: input, shape index: {}]
  %s7 = inlined_call_operand.hbm [shape: f32[3,1,128], index: 7, kind: input, shape index: {}]
  %s8 = inlined_call_operand.hbm [shape: f32[3,128,128], index: 8, kind: input, shape index: {}]
  %s9 = inlined_call_operand.hbm [shape: f32[3,1,128], index: 9, kind: input, shape index: {}]
  %s10 = inlined_call_operand.hbm [shape: f32[2,64,128], index: 10, kind: output, shape index: {}]
  %s11 = sld [smem:[#allocation0]]
  $region109: #{tpu_custom_call.1} parent=0
    _
  %s13 = ssub.s32 1, %s11
  %s14 = scalar_select 0, %s13, %s11
  %16 = dma.hbm_to_smem %s0, 16, [#allocation5], [#allocation4]
  %17 = dma.done [#allocation4], 16
  %18 = sfence
  $region1: #{tpu_custom_call.1} parent=0
    #allocation6 [shape = 'u8[512]{0}', space=vmem, size = 0x400, scoped, tag = 'input window, operand 2, single buffered']
    #allocation7 [shape = 's32[2]{0}', space=sflag, size = 0x8, scoped, tag = 'scoped memory for tpu_custom_call.1']
    #allocation8 [shape = 's32[2]{0}', space=sflag, size = 0x8, scoped, tag = 'scoped memory for tpu_custom_call.1']
    #allocation9 [shape = 'u8[512]{0}', space=vmem, size = 0x400, scoped, tag = 'input window, operand 3, single buffered']
    #allocation10 [shape = 's32[1]{0}', space=sflag, size = 0x4, scoped, tag = 'scoped memory for tpu_custom_call.1']
    #allocation11 [shape = 'u8[786432]{0}', space=vmem, size = 0xc0000, scoped, tag = 'input window, operand 4']
    #allocation12 [shape = 'u8[2048]{0}', space=vmem, size = 0x800, scoped, tag = 'input window, operand 5']
    #allocation13 [shape = 'u8[131072]{0}', space=vmem, size = 0x20000, scoped, tag = 'input window, operand 6']
    #allocation14 [shape = 'u8[1024]{0}', space=vmem, size = 0x400, scoped, tag = 'input window, operand 7']
    #allocation15 [shape = 'u8[131072]{0}', space=vmem, size = 0x20000, scoped, tag = 'input window, operand 8']
    #allocation16 [shape = 'u8[1024]{0}', space=vmem, size = 0x400, scoped, tag = 'input window, operand 9']
    #allocation17 [shape = 'u8[65536]{0}', space=vmem, size = 0x10000, scoped, tag = 'output window, operand 0, single buffered']
    %19 = vsyncpa [#allocation7], 0
    %20 = vsyncpa [#allocation10], 0
    %21 = vsyncpa [#allocation8], 0
    loop: start=0, step=1, limit=5
    $region2: #{tpu_custom_call.1} parent=1 // loop_pre_header
      _
    $region3: #{tpu_custom_call.1} parent=1 // loop_header
      %s23 = sphi 0, %s27
      %p24 = scmp.ge.s32.totalorder %s23, 5
      %s31 = sphi 0, %s31
      %s33 = sphi 0, %s31
      %s34 = sphi 0, %s33
      %s48 = sphi 0, %s34
      %s52 = sphi 0, %s52
      %s54 = sphi 0, %s52
      %s55 = sphi 0, %s54
      %s69 = sphi 0, %s55
      %s73 = sphi 0, %s73
      %s75 = sphi 0, %s73
      %s76 = sphi 0, %s75
      %s90 = sphi 0, %s76
      %s96 = sphi 0, %s98
      %s99 = sphi 0, %s96
      %s100 = sphi 0, %s99
      %s116 = sphi 0, %s100
      %s122 = sphi 0, %s124
      %s125 = sphi 0, %s122
      %s126 = sphi 0, %s125
      %s142 = sphi 0, %s126
      %s148 = sphi 0, %s150
      %s151 = sphi 0, %s148
      %s152 = sphi 0, %s151
      %s168 = sphi 0, %s152
      %s174 = sphi 0, %s176
      %s177 = sphi 0, %s174
      %s178 = sphi 0, %s177
      %s194 = sphi 0, %s178
      %s200 = sphi 0, %s202
      %s203 = sphi 0, %s200
      %s204 = sphi 0, %s203
      %s220 = sphi 0, %s204
      %s226 = sphi 0, %s228
      %s229 = sphi 0, %s226
      %s230 = sphi 0, %s229
      %s246 = sphi 0, %s230
      %s250 = sphi 0, %s250
      %s252 = sphi 0, %s250
      %s253 = sphi 0, %s252
      %s267 = sphi 0, %s253
    $region4: #{tpu_custom_call.1} parent=1 // loop_header_branch
      %26 = sbr.rel (%p24) target = $region8
    $region5: #{tpu_custom_call.1} parent=1 // loop_body
      %s28 = ssub.s32 %s23, 1
      %s29 = ssub.s32 %s23, 2
      %s30 = sadd.s32 %s23, 1
      %s32 = sadd.s32 %s31, 1
      %p35 = scmp.eq.s32.totalorder %s23, 2
      %p36 = scmp.ne.s32.totalorder %s31, %s33
      %p37 = scmp.eq.s32.totalorder %s23, 0
      %p38 = por %p36, %p37
      %p39 = scmp.ne.s32.totalorder %s31, %s33
      %p40 = scmp.eq.s32.totalorder %s28, 2
      %p41 = por %p39, %p40
      %p42 = scmp.ne.s32.totalorder %s33, %s34
      %p43 = scmp.eq.s32.totalorder %s28, 0
      %p44 = por %p42, %p43
      %p45 = scmp.ne.s32.totalorder %s33, %s34
      %p46 = scmp.eq.s32.totalorder %s29, 2
      %p47 = por %p45, %p46
      %p49 = scmp.ne.s32.totalorder %s34, %s48
      %p50 = scmp.eq.s32.totalorder %s29, 0
      %p51 = por %p49, %p50
      %s53 = sadd.s32 %s52, 1
      %p56 = scmp.eq.s32.totalorder %s23, 2
      %p57 = scmp.ne.s32.totalorder %s52, %s54
      %p58 = scmp.eq.s32.totalorder %s23, 0
      %p59 = por %p57, %p58
      %p60 = scmp.ne.s32.totalorder %s52, %s54
      %p61 = scmp.eq.s32.totalorder %s28, 2
      %p62 = por %p60, %p61
      %p63 = scmp.ne.s32.totalorder %s54, %s55
      %p64 = scmp.eq.s32.totalorder %s28, 0
      %p65 = por %p63, %p64
      %p66 = scmp.ne.s32.totalorder %s54, %s55
      %p67 = scmp.eq.s32.totalorder %s29, 2
      %p68 = por %p66, %p67
      %p70 = scmp.ne.s32.totalorder %s55, %s69
      %p71 = scmp.eq.s32.totalorder %s29, 0
      %p72 = por %p70, %p71
      %s74 = sadd.s32 %s73, 1
      %p77 = scmp.eq.s32.totalorder %s23, 2
      %p78 = scmp.ne.s32.totalorder %s73, %s75
      %p79 = scmp.eq.s32.totalorder %s23, 0
      %p80 = por %p78, %p79
      %p81 = scmp.ne.s32.totalorder %s73, %s75
      %p82 = scmp.eq.s32.totalorder %s28, 2
      %p83 = por %p81, %p82
      %p84 = scmp.ne.s32.totalorder %s75, %s76
      %p85 = scmp.eq.s32.totalorder %s28, 0
      %p86 = por %p84, %p85
      %p87 = scmp.ne.s32.totalorder %s75, %s76
      %p88 = scmp.eq.s32.totalorder %s29, 2
      %p89 = por %p87, %p88
      %p91 = scmp.ne.s32.totalorder %s76, %s90
      %p92 = scmp.eq.s32.totalorder %s29, 0
      %p93 = por %p91, %p92
      %s94 = ssub.s32 %s23, %s30
      %p95 = scmp.eq.s32.totalorder %s94, 0
      %s97 = sadd.s32 %s96, 1
      %s98 = scalar_select %p95, %s96, %s97
      %p101 = pneg %p95
      %p102 = scmp.eq.s32.totalorder %s23, 2
      %p103 = por %p101, %p102
      %p104 = scmp.ne.s32.totalorder %s96, %s99
      %p105 = scmp.eq.s32.totalorder %s23, 0
      %p106 = por %p104, %p105
      %p107 = scmp.ne.s32.totalorder %s96, %s99
      %p108 = scmp.eq.s32.totalorder %s28, 2
      %p109 = por %p107, %p108
      %p110 = scmp.ne.s32.totalorder %s99, %s100
      %p111 = scmp.eq.s32.totalorder %s28, 0
      %p112 = por %p110, %p111
      %p113 = scmp.ne.s32.totalorder %s99, %s100
      %p114 = scmp.eq.s32.totalorder %s29, 2
      %p115 = por %p113, %p114
      %p117 = scmp.ne.s32.totalorder %s100, %s116
      %p118 = scmp.eq.s32.totalorder %s29, 0
      %p119 = por %p117, %p118
      %s120 = ssub.s32 %s23, %s30
      %p121 = scmp.eq.s32.totalorder %s120, 0
      %s123 = sadd.s32 %s122, 1
      %s124 = scalar_select %p121, %s122, %s123
      %p127 = pneg %p121
      %p128 = scmp.eq.s32.totalorder %s23, 2
      %p129 = por %p127, %p128
      %p130 = scmp.ne.s32.totalorder %s122, %s125
      %p131 = scmp.eq.s32.totalorder %s23, 0
      %p132 = por %p130, %p131
      %p133 = scmp.ne.s32.totalorder %s122, %s125
      %p134 = scmp.eq.s32.totalorder %s28, 2
      %p135 = por %p133, %p134
      %p136 = scmp.ne.s32.totalorder %s125, %s126
      %p137 = scmp.eq.s32.totalorder %s28, 0
      %p138 = por %p136, %p137
      %p139 = scmp.ne.s32.totalorder %s125, %s126
      %p140 = scmp.eq.s32.totalorder %s29, 2
      %p141 = por %p139, %p140
      %p143 = scmp.ne.s32.totalorder %s126, %s142
      %p144 = scmp.eq.s32.totalorder %s29, 0
      %p145 = por %p143, %p144
      %s146 = ssub.s32 %s23, %s30
      %p147 = scmp.eq.s32.totalorder %s146, 0
      %s149 = sadd.s32 %s148, 1
      %s150 = scalar_select %p147, %s148, %s149
      %p153 = pneg %p147
      %p154 = scmp.eq.s32.totalorder %s23, 2
      %p155 = por %p153, %p154
      %p156 = scmp.ne.s32.totalorder %s148, %s151
      %p157 = scmp.eq.s32.totalorder %s23, 0
      %p158 = por %p156, %p157
      %p159 = scmp.ne.s32.totalorder %s148, %s151
      %p160 = scmp.eq.s32.totalorder %s28, 2
      %p161 = por %p159, %p160
      %p162 = scmp.ne.s32.totalorder %s151, %s152
      %p163 = scmp.eq.s32.totalorder %s28, 0
      %p164 = por %p162, %p163
      %p165 = scmp.ne.s32.totalorder %s151, %s152
      %p166 = scmp.eq.s32.totalorder %s29, 2
      %p167 = por %p165, %p166
      %p169 = scmp.ne.s32.totalorder %s152, %s168
      %p170 = scmp.eq.s32.totalorder %s29, 0
      %p171 = por %p169, %p170
      %s172 = ssub.s32 %s23, %s30
      %p173 = scmp.eq.s32.totalorder %s172, 0
      %s175 = sadd.s32 %s174, 1
      %s176 = scalar_select %p173, %s174, %s175
      %p179 = pneg %p173
      %p180 = scmp.eq.s32.totalorder %s23, 2
      %p181 = por %p179, %p180
      %p182 = scmp.ne.s32.totalorder %s174, %s177
      %p183 = scmp.eq.s32.totalorder %s23, 0
      %p184 = por %p182, %p183
      %p185 = scmp.ne.s32.totalorder %s174, %s177
      %p186 = scmp.eq.s32.totalorder %s28, 2
      %p187 = por %p185, %p186
      %p188 = scmp.ne.s32.totalorder %s177, %s178
      %p189 = scmp.eq.s32.totalorder %s28, 0
      %p190 = por %p188, %p189
      %p191 = scmp.ne.s32.totalorder %s177, %s178
      %p192 = scmp.eq.s32.totalorder %s29, 2
      %p193 = por %p191, %p192
      %p195 = scmp.ne.s32.totalorder %s178, %s194
      %p196 = scmp.eq.s32.totalorder %s29, 0
      %p197 = por %p195, %p196
      %s198 = ssub.s32 %s23, %s30
      %p199 = scmp.eq.s32.totalorder %s198, 0
      %s201 = sadd.s32 %s200, 1
      %s202 = scalar_select %p199, %s200, %s201
      %p205 = pneg %p199
      %p206 = scmp.eq.s32.totalorder %s23, 2
      %p207 = por %p205, %p206
      %p208 = scmp.ne.s32.totalorder %s200, %s203
      %p209 = scmp.eq.s32.totalorder %s23, 0
      %p210 = por %p208, %p209
      %p211 = scmp.ne.s32.totalorder %s200, %s203
      %p212 = scmp.eq.s32.totalorder %s28, 2
      %p213 = por %p211, %p212
      %p214 = scmp.ne.s32.totalorder %s203, %s204
      %p215 = scmp.eq.s32.totalorder %s28, 0
      %p216 = por %p214, %p215
      %p217 = scmp.ne.s32.totalorder %s203, %s204
      %p218 = scmp.eq.s32.totalorder %s29, 2
      %p219 = por %p217, %p218
      %p221 = scmp.ne.s32.totalorder %s204, %s220
      %p222 = scmp.eq.s32.totalorder %s29, 0
      %p223 = por %p221, %p222
      %s224 = ssub.s32 %s23, %s30
      %p225 = scmp.eq.s32.totalorder %s224, 0
      %s227 = sadd.s32 %s226, 1
      %s228 = scalar_select %p225, %s226, %s227
      %p231 = pneg %p225
      %p232 = scmp.eq.s32.totalorder %s23, 2
      %p233 = por %p231, %p232
      %p234 = scmp.ne.s32.totalorder %s226, %s229
      %p235 = scmp.eq.s32.totalorder %s23, 0
      %p236 = por %p234, %p235
      %p237 = scmp.ne.s32.totalorder %s226, %s229
      %p238 = scmp.eq.s32.totalorder %s28, 2
      %p239 = por %p237, %p238
      %p240 = scmp.ne.s32.totalorder %s229, %s230
      %p241 = scmp.eq.s32.totalorder %s28, 0
      %p242 = por %p240, %p241
      %p243 = scmp.ne.s32.totalorder %s229, %s230
      %p244 = scmp.eq.s32.totalorder %s29, 2
      %p245 = por %p243, %p244
      %p247 = scmp.ne.s32.totalorder %s230, %s246
      %p248 = scmp.eq.s32.totalorder %s29, 0
      %p249 = por %p247, %p248
      %s251 = sadd.s32 %s250, 1
      %p254 = scmp.eq.s32.totalorder %s23, 2
      %p255 = scmp.ne.s32.totalorder %s250, %s252
      %p256 = scmp.eq.s32.totalorder %s23, 0
      %p257 = por %p255, %p256
      %p258 = scmp.ne.s32.totalorder %s250, %s252
      %p259 = scmp.eq.s32.totalorder %s28, 2
      %p260 = por %p258, %p259
      %p261 = scmp.ne.s32.totalorder %s252, %s253
      %p262 = scmp.eq.s32.totalorder %s28, 0
      %p263 = por %p261, %p262
      %p264 = scmp.ne.s32.totalorder %s252, %s253
      %p265 = scmp.eq.s32.totalorder %s29, 2
      %p266 = por %p264, %p265
      %p268 = scmp.ne.s32.totalorder %s253, %s267
      %p269 = scmp.eq.s32.totalorder %s29, 0
      %p270 = por %p268, %p269
      %p271 = scmp.le.s32.totalorder 1, %s23
      %p272 = scmp.lt.s32.totalorder %s23, 4
      %p273 = pnand %p271, %p272
      %p274 = pneg %p273
      // Predicated region
      $region9: #{tpu_custom_call.1} parent=5 // pred_check
        _
      $region10: #{tpu_custom_call.1} parent=5 // pred_check_branch
        %276 = sbr.rel (%p273) target = $region12
      $region11: #{tpu_custom_call.1} parent=5 // pred_region
        %s277 = ssub.s32 %s23, 1
        // Predicated region
        $region13: #{tpu_custom_call.1} parent=11 // pred_check
          %p278 = pneg %p44
        $region14: #{tpu_custom_call.1} parent=11 // pred_check_branch
          %280 = sbr.rel (%p278) target = $region16
        $region15: #{tpu_custom_call.1} parent=11 // pred_region
          _
        $region16: #{tpu_custom_call.1} parent=11 // pred_fallthru
          _
        // Predicated region
        $region17: #{tpu_custom_call.1} parent=11 // pred_check
          %p281 = pneg %p65
        $region18: #{tpu_custom_call.1} parent=11 // pred_check_branch
          %283 = sbr.rel (%p281) target = $region20
        $region19: #{tpu_custom_call.1} parent=11 // pred_region
          %s285 = ssub.s32 16, 16
          %286 = vsyncadd [#allocation7], %s285
          %s288 = sshll.u32 [#allocation6], 4
          %s289 = int_to_ptr.vmem [resolvable:$true] %s288
          %291 = dma.hbm_to_vmem [thread:$0]  %s2, 16, %s289, [#allocation7]
        $region20: #{tpu_custom_call.1} parent=11 // pred_fallthru
          _
        // Predicated region
        $region21: #{tpu_custom_call.1} parent=11 // pred_check
          %p292 = pneg %p86
        $region22: #{tpu_custom_call.1} parent=11 // pred_check_branch
          %294 = sbr.rel (%p292) target = $region24
        $region23: #{tpu_custom_call.1} parent=11 // pred_region
          %s296 = ssub.s32 16, 16
          %297 = vsyncadd [#allocation10], %s296
          %s299 = sshll.u32 [#allocation9], 4
          %s300 = int_to_ptr.vmem [resolvable:$true] %s299
          %302 = dma.hbm_to_vmem [thread:$0]  %s3, 16, %s300, [#allocation10]
        $region24: #{tpu_custom_call.1} parent=11 // pred_fallthru
          _
      $region12: #{tpu_custom_call.1} parent=5 // pred_fallthru
        _
      %p303 = scmp.lt.s32.totalorder %s23, 3
      // Predicated region
      $region25: #{tpu_custom_call.1} parent=5 // pred_check
        %p304 = pneg %p303
      $region26: #{tpu_custom_call.1} parent=5 // pred_check_branch
        %306 = sbr.rel (%p304) target = $region28
      $region27: #{tpu_custom_call.1} parent=5 // pred_region
        // Predicated region
        $region29: #{tpu_custom_call.1} parent=27 // pred_check
          %p307 = pneg %p106
        $region30: #{tpu_custom_call.1} parent=27 // pred_check_branch
          %309 = sbr.rel (%p307) target = $region32
        $region31: #{tpu_custom_call.1} parent=27 // pred_region
          %s310 = sand.u32 %s23, 1
          %s311 = scalar_lea.sflag [#allocation7], %s310
          %s312 = sand.u32 %s96, 1
          %s313 = smul.addr %s312, 768
          %s314 = scalar_lea.vmem [#allocation11], %s313
          %s316 = ssub.s32 12288, 12288
          %317 = vsyncadd %s311, %s316
          %s318 = smul.addr %s23, 96
          %s319 = smul.addr %s318, 128
          %s320 = scalar_lea.hbm %s4, %s319
          %s321 = sshll.u32 %s314, 4
          %s322 = int_to_ptr.vmem [resolvable:$true] %s321
          %327 = dma.hbm_to_vmem [thread:$0]  %s320, 12288, %s322, %s311, 256, 256, 16
        $region32: #{tpu_custom_call.1} parent=27 // pred_fallthru
          _
        // Predicated region
        $region33: #{tpu_custom_call.1} parent=27 // pred_check
          %p328 = pneg %p132
        $region34: #{tpu_custom_call.1} parent=27 // pred_check_branch
          %330 = sbr.rel (%p328) target = $region36
        $region35: #{tpu_custom_call.1} parent=27 // pred_region
          %s331 = sand.u32 %s23, 1
          %s332 = scalar_lea.sflag [#allocation7], %s331
          %s333 = sand.u32 %s122, 1
          %s334 = smul.addr %s333, 2
          %s335 = scalar_lea.vmem [#allocation12], %s334
          %s337 = ssub.s32 32, 32
          %338 = vsyncadd %s332, %s337
          %s339 = smul.addr %s23, 2
          %s340 = smul.addr %s339, 16
          %s341 = scalar_lea.hbm %s5, %s340
          %s343 = sshll.u32 %s335, 4
          %s344 = int_to_ptr.vmem [resolvable:$true] %s343
          %346 = dma.hbm_to_vmem [thread:$0]  %s341, 32, %s344, %s332
        $region36: #{tpu_custom_call.1} parent=27 // pred_fallthru
          _
        // Predicated region
        $region37: #{tpu_custom_call.1} parent=27 // pred_check
          %p347 = pneg %p158
        $region38: #{tpu_custom_call.1} parent=27 // pred_check_branch
          %349 = sbr.rel (%p347) target = $region40
        $region39: #{tpu_custom_call.1} parent=27 // pred_region
          %s350 = sand.u32 %s23, 1
          %s351 = scalar_lea.sflag [#allocation7], %s350
          %s352 = sand.u32 %s148, 1
          %s353 = smul.addr %s352, 128
          %s354 = scalar_lea.vmem [#allocation13], %s353
          %s356 = ssub.s32 2048, 2048
          %357 = vsyncadd %s351, %s356
          %s358 = smul.addr %s23, 16
          %s359 = smul.addr %s358, 128
          %s360 = scalar_lea.hbm %s6, %s359
          %s361 = sshll.u32 %s354, 4
          %s362 = int_to_ptr.vmem [resolvable:$true] %s361
          %367 = dma.hbm_to_vmem [thread:$0]  %s360, 2048, %s362, %s351, 128, 128, 8
        $region40: #{tpu_custom_call.1} parent=27 // pred_fallthru
          _
        // Predicated region
        $region41: #{tpu_custom_call.1} parent=27 // pred_check
          %p368 = pneg %p184
        $region42: #{tpu_custom_call.1} parent=27 // pred_check_branch
          %370 = sbr.rel (%p368) target = $region44
        $region43: #{tpu_custom_call.1} parent=27 // pred_region
          %s371 = sand.u32 %s23, 1
          %s372 = scalar_lea.sflag [#allocation7], %s371
          %s373 = sand.u32 %s174, 1
          %s374 = scalar_lea.vmem [#allocation14], %s373
          %s376 = ssub.s32 16, 16
          %377 = vsyncadd %s372, %s376
          %s378 = smul.addr %s23, 16
          %s379 = scalar_lea.hbm %s7, %s378
          %s381 = sshll.u32 %s374, 4
          %s382 = int_to_ptr.vmem [resolvable:$true] %s381
          %384 = dma.hbm_to_vmem [thread:$0]  %s379, 16, %s382, %s372
        $region44: #{tpu_custom_call.1} parent=27 // pred_fallthru
          _
        // Predicated region
        $region45: #{tpu_custom_call.1} parent=27 // pred_check
          %p385 = pneg %p210
        $region46: #{tpu_custom_call.1} parent=27 // pred_check_branch
          %387 = sbr.rel (%p385) target = $region48
        $region47: #{tpu_custom_call.1} parent=27 // pred_region
          %s388 = sand.u32 %s23, 1
          %s389 = scalar_lea.sflag [#allocation7], %s388
          %s390 = sand.u32 %s200, 1
          %s391 = smul.addr %s390, 128
          %s392 = scalar_lea.vmem [#allocation15], %s391
          %s394 = ssub.s32 2048, 2048
          %395 = vsyncadd %s389, %s394
          %s396 = smul.addr %s23, 16
          %s397 = smul.addr %s396, 128
          %s398 = scalar_lea.hbm %s8, %s397
          %s399 = sshll.u32 %s392, 4
          %s400 = int_to_ptr.vmem [resolvable:$true] %s399
          %405 = dma.hbm_to_vmem [thread:$0]  %s398, 2048, %s400, %s389, 128, 128, 8
        $region48: #{tpu_custom_call.1} parent=27 // pred_fallthru
          _
        // Predicated region
        $region49: #{tpu_custom_call.1} parent=27 // pred_check
          %p406 = pneg %p236
        $region50: #{tpu_custom_call.1} parent=27 // pred_check_branch
          %408 = sbr.rel (%p406) target = $region52
        $region51: #{tpu_custom_call.1} parent=27 // pred_region
          %s409 = sand.u32 %s23, 1
          %s410 = scalar_lea.sflag [#allocation7], %s409
          %s411 = sand.u32 %s226, 1
          %s412 = scalar_lea.vmem [#allocation16], %s411
          %s414 = ssub.s32 16, 16
          %415 = vsyncadd %s410, %s414
          %s416 = smul.addr %s23, 16
          %s417 = scalar_lea.hbm %s9, %s416
          %s419 = sshll.u32 %s412, 4
          %s420 = int_to_ptr.vmem [resolvable:$true] %s419
          %422 = dma.hbm_to_vmem [thread:$0]  %s417, 16, %s420, %s410
        $region52: #{tpu_custom_call.1} parent=27 // pred_fallthru
          _
      $region28: #{tpu_custom_call.1} parent=5 // pred_fallthru
        _
      %p423 = scmp.le.s32.totalorder 1, %s23
      %p424 = scmp.lt.s32.totalorder %s23, 4
      %p425 = pnand %p423, %p424
      %p426 = pneg %p425
      // Predicated region
      $region53: #{tpu_custom_call.1} parent=5 // pred_check
        _
      $region54: #{tpu_custom_call.1} parent=5 // pred_check_branch
        %428 = sbr.rel (%p425) target = $region56
      $region55: #{tpu_custom_call.1} parent=5 // pred_region
        %s429 = ssub.s32 %s23, 1
        // Predicated region
        $region57: #{tpu_custom_call.1} parent=55 // pred_check
          %p430 = pneg %p65
        $region58: #{tpu_custom_call.1} parent=55 // pred_check_branch
          %432 = sbr.rel (%p430) target = $region60
        $region59: #{tpu_custom_call.1} parent=55 // pred_region
          %433 = dma.done [#allocation7], 16
        $region60: #{tpu_custom_call.1} parent=55 // pred_fallthru
          _
        // Predicated region
        $region61: #{tpu_custom_call.1} parent=55 // pred_check
          %p434 = pneg %p86
        $region62: #{tpu_custom_call.1} parent=55 // pred_check_branch
          %436 = sbr.rel (%p434) target = $region64
        $region63: #{tpu_custom_call.1} parent=55 // pred_region
          %437 = dma.done [#allocation10], 16
        $region64: #{tpu_custom_call.1} parent=55 // pred_fallthru
          _
        %s438 = sand.u32 %s28, 1
        %s439 = scalar_lea.sflag [#allocation7], %s438
        %s440 = sand.u32 %s99, 1
        %s441 = smul.addr %s440, 768
        %s442 = scalar_lea.vmem [#allocation11], %s441
        // Predicated region
        $region65: #{tpu_custom_call.1} parent=55 // pred_check
          %p443 = pneg %p112
        $region66: #{tpu_custom_call.1} parent=55 // pred_check_branch
          %445 = sbr.rel (%p443) target = $region68
        $region67: #{tpu_custom_call.1} parent=55 // pred_region
          %446 = dma.done %s439, 12288
        $region68: #{tpu_custom_call.1} parent=55 // pred_fallthru
          _
        %s447 = sand.u32 %s28, 1
        %s448 = scalar_lea.sflag [#allocation7], %s447
        %s449 = sand.u32 %s125, 1
        %s450 = smul.addr %s449, 2
        %s451 = scalar_lea.vmem [#allocation12], %s450
        // Predicated region
        $region69: #{tpu_custom_call.1} parent=55 // pred_check
          %p452 = pneg %p138
        $region70: #{tpu_custom_call.1} parent=55 // pred_check_branch
          %454 = sbr.rel (%p452) target = $region72
        $region71: #{tpu_custom_call.1} parent=55 // pred_region
          %455 = dma.done %s448, 32
        $region72: #{tpu_custom_call.1} parent=55 // pred_fallthru
          _
        %s456 = sand.u32 %s28, 1
        %s457 = scalar_lea.sflag [#allocation7], %s456
        %s458 = sand.u32 %s151, 1
        %s459 = smul.addr %s458, 128
        %s460 = scalar_lea.vmem [#allocation13], %s459
        // Predicated region
        $region73: #{tpu_custom_call.1} parent=55 // pred_check
          %p461 = pneg %p164
        $region74: #{tpu_custom_call.1} parent=55 // pred_check_branch
          %463 = sbr.rel (%p461) target = $region76
        $region75: #{tpu_custom_call.1} parent=55 // pred_region
          %464 = dma.done %s457, 2048
        $region76: #{tpu_custom_call.1} parent=55 // pred_fallthru
          _
        %s465 = sand.u32 %s28, 1
        %s466 = scalar_lea.sflag [#allocation7], %s465
        %s467 = sand.u32 %s177, 1
        %s468 = scalar_lea.vmem [#allocation14], %s467
        // Predicated region
        $region77: #{tpu_custom_call.1} parent=55 // pred_check
          %p469 = pneg %p190
        $region78: #{tpu_custom_call.1} parent=55 // pred_check_branch
          %471 = sbr.rel (%p469) target = $region80
        $region79: #{tpu_custom_call.1} parent=55 // pred_region
          %472 = dma.done %s466, 16
        $region80: #{tpu_custom_call.1} parent=55 // pred_fallthru
          _
        %s473 = sand.u32 %s28, 1
        %s474 = scalar_lea.sflag [#allocation7], %s473
        %s475 = sand.u32 %s203, 1
        %s476 = smul.addr %s475, 128
        %s477 = scalar_lea.vmem [#allocation15], %s476
        // Predicated region
        $region81: #{tpu_custom_call.1} parent=55 // pred_check
          %p478 = pneg %p216
        $region82: #{tpu_custom_call.1} parent=55 // pred_check_branch
          %480 = sbr.rel (%p478) target = $region84
        $region83: #{tpu_custom_call.1} parent=55 // pred_region
          %481 = dma.done %s474, 2048
        $region84: #{tpu_custom_call.1} parent=55 // pred_fallthru
          _
        %s482 = sand.u32 %s28, 1
        %s483 = scalar_lea.sflag [#allocation7], %s482
        %s484 = sand.u32 %s229, 1
        %s485 = scalar_lea.vmem [#allocation16], %s484
        // Predicated region
        $region85: #{tpu_custom_call.1} parent=55 // pred_check
          %p486 = pneg %p242
        $region86: #{tpu_custom_call.1} parent=55 // pred_check_branch
          %488 = sbr.rel (%p486) target = $region88
        $region87: #{tpu_custom_call.1} parent=55 // pred_region
          %489 = dma.done %s483, 16
        $region88: #{tpu_custom_call.1} parent=55 // pred_fallthru
          _
        %p490 = pneg %p44
        %p491 = pneg %p41
        %p492 = pneg %p65
        %p493 = pneg %p62
        %p494 = pneg %p86
        %p495 = pneg %p83
        %s496 = sand.u32 %s28, 1
        %s497 = scalar_lea.sflag [#allocation7], %s496
        %s498 = sand.u32 %s99, 1
        %s499 = smul.addr %s498, 768
        %s500 = scalar_lea.vmem [#allocation11], %s499
        %p501 = pneg %p112
        %p502 = pneg %p109
        %s503 = sand.u32 %s28, 1
        %s504 = scalar_lea.sflag [#allocation7], %s503
        %s505 = sand.u32 %s125, 1
        %s506 = smul.addr %s505, 2
        %s507 = scalar_lea.vmem [#allocation12], %s506
        %p508 = pneg %p138
        %p509 = pneg %p135
        %s510 = sand.u32 %s28, 1
        %s511 = scalar_lea.sflag [#allocation7], %s510
        %s512 = sand.u32 %s151, 1
        %s513 = smul.addr %s512, 128
        %s514 = scalar_lea.vmem [#allocation13], %s513
        %p515 = pneg %p164
        %p516 = pneg %p161
        %s517 = sand.u32 %s28, 1
        %s518 = scalar_lea.sflag [#allocation7], %s517
        %s519 = sand.u32 %s177, 1
        %s520 = scalar_lea.vmem [#allocation14], %s519
        %p521 = pneg %p190
        %p522 = pneg %p187
        %s523 = sand.u32 %s28, 1
        %s524 = scalar_lea.sflag [#allocation7], %s523
        %s525 = sand.u32 %s203, 1
        %s526 = smul.addr %s525, 128
        %s527 = scalar_lea.vmem [#allocation15], %s526
        %p528 = pneg %p216
        %p529 = pneg %p213
        %s530 = sand.u32 %s28, 1
        %s531 = scalar_lea.sflag [#allocation7], %s530
        %s532 = sand.u32 %s229, 1
        %s533 = scalar_lea.vmem [#allocation16], %s532
        %p534 = pneg %p242
        %p535 = pneg %p239
        %p536 = pneg %p263
        %p537 = pneg %p260
        %p538 = scmp.eq.s32.totalorder %s28, 0
        // Predicated region
        $region89: #{tpu_custom_call.1} parent=55 // pred_check
          %p539 = pneg %p538
        $region90: #{tpu_custom_call.1} parent=55 // pred_check_branch
          %541 = sbr.rel (%p539) target = $region92
        $region91: #{tpu_custom_call.1} parent=55 // pred_region
          %542 = vst [vmem:[#allocation2] sm:$0xff] 0.0
          %543 = vst [vmem:[#allocation2 + $0x8] sm:$0xff] 0.0
          %544 = vst [vmem:[#allocation2 + $0x10] sm:$0xff] 0.0
          %545 = vst [vmem:[#allocation2 + $0x18] sm:$0xff] 0.0
          %546 = vst [vmem:[#allocation2 + $0x20] sm:$0xff] 0.0
          %547 = vst [vmem:[#allocation2 + $0x28] sm:$0xff] 0.0
          %548 = vst [vmem:[#allocation2 + $0x30] sm:$0xff] 0.0
          %549 = vst [vmem:[#allocation2 + $0x38] sm:$0xff] 0.0
          %550 = vst [vmem:[#allocation2 + $0x40] sm:$0xff] 0.0
          %551 = vst [vmem:[#allocation2 + $0x48] sm:$0xff] 0.0
          %552 = vst [vmem:[#allocation2 + $0x50] sm:$0xff] 0.0
          %553 = vst [vmem:[#allocation2 + $0x58] sm:$0xff] 0.0
          %554 = vst [vmem:[#allocation2 + $0x60] sm:$0xff] 0.0
          %555 = vst [vmem:[#allocation2 + $0x68] sm:$0xff] 0.0
          %556 = vst [vmem:[#allocation2 + $0x70] sm:$0xff] 0.0
          %557 = vst [vmem:[#allocation2 + $0x78] sm:$0xff] 0.0
          %558 = vst [vmem:[#allocation2 + $0x80] sm:$0xff] 0.0
          %559 = vst [vmem:[#allocation2 + $0x88] sm:$0xff] 0.0
          %560 = vst [vmem:[#allocation3] sm:$0xff] 0.0
          %561 = vst [vmem:[#allocation3 + $0x8] sm:$0xff] 0.0
          %562 = vst [vmem:[#allocation3 + $0x10] sm:$0xff] 0.0
          %563 = vst [vmem:[#allocation3 + $0x18] sm:$0xff] 0.0
          %564 = vst [vmem:[#allocation3 + $0x20] sm:$0xff] 0.0
          %565 = vst [vmem:[#allocation3 + $0x28] sm:$0xff] 0.0
          %566 = vst [vmem:[#allocation3 + $0x30] sm:$0xff] 0.0
          %567 = vst [vmem:[#allocation3 + $0x38] sm:$0xff] 0.0
          %568 = vst [vmem:[#allocation3 + $0x40] sm:$0xff] 0.0
          %569 = vst [vmem:[#allocation3 + $0x48] sm:$0xff] 0.0
          %570 = vst [vmem:[#allocation3 + $0x50] sm:$0xff] 0.0
          %571 = vst [vmem:[#allocation3 + $0x58] sm:$0xff] 0.0
          %572 = vst [vmem:[#allocation3 + $0x60] sm:$0xff] 0.0
          %573 = vst [vmem:[#allocation3 + $0x68] sm:$0xff] 0.0
          %574 = vst [vmem:[#allocation3 + $0x70] sm:$0xff] 0.0
          %575 = vst [vmem:[#allocation3 + $0x78] sm:$0xff] 0.0
          %v576 = vld [vmem:[%s1] sm:$0xff]
          %v577 = vld [vmem:[%s1 + $0x8] sm:$0xff]
          %v578 = vld [vmem:[%s1 + $0x10] sm:$0xff]
          %v579 = vld [vmem:[%s1 + $0x18] sm:$0xff]
          %v580 = vld [vmem:[%s1 + $0x20] sm:$0xff]
          %v581 = vld [vmem:[%s1 + $0x28] sm:$0xff]
          %v582 = vld [vmem:[%s1 + $0x30] sm:$0xff]
          %v583 = vld [vmem:[%s1 + $0x38] sm:$0xff]
          %v584 = vld [vmem:[%s1 + $0x40] sm:$0xff]
          %v585 = vld [vmem:[%s1 + $0x48] sm:$0xff]
          %v586 = vld [vmem:[%s1 + $0x50] sm:$0xff]
          %v587 = vld [vmem:[%s1 + $0x58] sm:$0xff]
          %v588 = vld [vmem:[%s1 + $0x60] sm:$0xff]
          %v589 = vld [vmem:[%s1 + $0x68] sm:$0xff]
          %v590 = vld [vmem:[%s1 + $0x70] sm:$0xff]
          %v591 = vld [vmem:[%s1 + $0x78] sm:$0xff]
          %v592 = vld [vmem:[#allocation6] sm:$0x1]
          %594 = vset.pattern.permute.xlu0 0
          %595 = vperm.xlu0 %594, %v576
          %v596 = vpop.permute.xlu0 %595
          %599 = vset.pattern.permute.xlu0 0
          %600 = vperm.xlu0 %599, %v577
          %v601 = vpop.permute.xlu0 %600
          %604 = vset.pattern.permute.xlu0 0
          %605 = vperm.xlu0 %604, %v578
          %v606 = vpop.permute.xlu0 %605
          %609 = vset.pattern.permute.xlu0 0
          %610 = vperm.xlu0 %609, %v579
          %v611 = vpop.permute.xlu0 %610
          %614 = vset.pattern.permute.xlu0 0
          %615 = vperm.xlu0 %614, %v580
          %v616 = vpop.permute.xlu0 %615
          %619 = vset.pattern.permute.xlu0 0
          %620 = vperm.xlu0 %619, %v581
          %v621 = vpop.permute.xlu0 %620
          %624 = vset.pattern.permute.xlu0 0
          %625 = vperm.xlu0 %624, %v582
          %v626 = vpop.permute.xlu0 %625
          %629 = vset.pattern.permute.xlu0 0
          %630 = vperm.xlu0 %629, %v583
          %v631 = vpop.permute.xlu0 %630
          %634 = vset.pattern.permute.xlu0 0
          %635 = vperm.xlu0 %634, %v584
          %v636 = vpop.permute.xlu0 %635
          %639 = vset.pattern.permute.xlu0 0
          %640 = vperm.xlu0 %639, %v585
          %v641 = vpop.permute.xlu0 %640
          %644 = vset.pattern.permute.xlu0 0
          %645 = vperm.xlu0 %644, %v586
          %v646 = vpop.permute.xlu0 %645
          %649 = vset.pattern.permute.xlu0 0
          %650 = vperm.xlu0 %649, %v587
          %v651 = vpop.permute.xlu0 %650
          %654 = vset.pattern.permute.xlu0 0
          %655 = vperm.xlu0 %654, %v588
          %v656 = vpop.permute.xlu0 %655
          %659 = vset.pattern.permute.xlu0 0
          %660 = vperm.xlu0 %659, %v589
          %v661 = vpop.permute.xlu0 %660
          %664 = vset.pattern.permute.xlu0 0
          %665 = vperm.xlu0 %664, %v590
          %v666 = vpop.permute.xlu0 %665
          %669 = vset.pattern.permute.xlu0 0
          %670 = vperm.xlu0 %669, %v591
          %v671 = vpop.permute.xlu0 %670
          %v674 = vlaneseq
          %v675 = vshrl.u32 %v674, 7
          %v676 = vsub.s32 0, %v675
          %v677 = vrot.slane %v592, %v676
          %v679 = vmul.f32 %v596, %v677
          %v680 = vmul.f32 %v601, %v677
          %v681 = vmul.f32 %v606, %v677
          %v682 = vmul.f32 %v611, %v677
          %v683 = vmul.f32 %v616, %v677
          %v684 = vmul.f32 %v621, %v677
          %v685 = vmul.f32 %v626, %v677
          %v686 = vmul.f32 %v631, %v677
          %v687 = vmul.f32 %v636, %v677
          %v688 = vmul.f32 %v641, %v677
          %v689 = vmul.f32 %v646, %v677
          %v690 = vmul.f32 %v651, %v677
          %v691 = vmul.f32 %v656, %v677
          %v692 = vmul.f32 %v661, %v677
          %v693 = vmul.f32 %v666, %v677
          %v694 = vmul.f32 %v671, %v677
          %v695 = vld [vmem:[#allocation9] sm:$0x1]
          %v697 = vlaneseq
          %v698 = vshrl.u32 %v697, 7
          %v699 = vsub.s32 0, %v698
          %v700 = vrot.slane %v695, %v699
          %v702 = vadd.f32 %v679, %v700
          %v703 = vadd.f32 %v680, %v700
          %v704 = vadd.f32 %v681, %v700
          %v705 = vadd.f32 %v682, %v700
          %v706 = vadd.f32 %v683, %v700
          %v707 = vadd.f32 %v684, %v700
          %v708 = vadd.f32 %v685, %v700
          %v709 = vadd.f32 %v686, %v700
          %v710 = vadd.f32 %v687, %v700
          %v711 = vadd.f32 %v688, %v700
          %v712 = vadd.f32 %v689, %v700
          %v713 = vadd.f32 %v690, %v700
          %v714 = vadd.f32 %v691, %v700
          %v715 = vadd.f32 %v692, %v700
          %v716 = vadd.f32 %v693, %v700
          %v717 = vadd.f32 %v694, %v700
          %718 = vst [vmem:[#allocation2 + $0x4] sm:$0xff] %v702
          %719 = vst [vmem:[#allocation2 + $0xc] sm:$0xff] %v703
          %720 = vst [vmem:[#allocation2 + $0x14] sm:$0xff] %v704
          %721 = vst [vmem:[#allocation2 + $0x1c] sm:$0xff] %v705
          %722 = vst [vmem:[#allocation2 + $0x24] sm:$0xff] %v706
          %723 = vst [vmem:[#allocation2 + $0x2c] sm:$0xff] %v707
          %724 = vst [vmem:[#allocation2 + $0x34] sm:$0xff] %v708
          %725 = vst [vmem:[#allocation2 + $0x3c] sm:$0xff] %v709
          %726 = vst [vmem:[#allocation2 + $0x4c] sm:$0xff] %v710
          %727 = vst [vmem:[#allocation2 + $0x54] sm:$0xff] %v711
          %728 = vst [vmem:[#allocation2 + $0x5c] sm:$0xff] %v712
          %729 = vst [vmem:[#allocation2 + $0x64] sm:$0xff] %v713
          %730 = vst [vmem:[#allocation2 + $0x6c] sm:$0xff] %v714
          %731 = vst [vmem:[#allocation2 + $0x74] sm:$0xff] %v715
          %732 = vst [vmem:[#allocation2 + $0x7c] sm:$0xff] %v716
          %733 = vst [vmem:[#allocation2 + $0x84] sm:$0xff] %v717
        $region92: #{tpu_custom_call.1} parent=55 // pred_fallthru
          _
        %s734 = sld [smem:[#allocation5 + %s28]]
        %s735 = ssub.s32 4, %s734
        %s736 = scalar_lea.vmem [#allocation2], %s735
        %v737 = vld [vmem:[%s736] sm:$0xff]
        %v738 = vld [vmem:[%s736 + $0x8] sm:$0xff]
        %v739 = vld [vmem:[%s736 + $0x10] sm:$0xff]
        %v740 = vld [vmem:[%s736 + $0x18] sm:$0xff]
        %v741 = vld [vmem:[%s736 + $0x20] sm:$0xff]
        %v742 = vld [vmem:[%s736 + $0x28] sm:$0xff]
        %v743 = vld [vmem:[%s736 + $0x30] sm:$0xff]
        %v744 = vld [vmem:[%s736 + $0x38] sm:$0xff]
        %s745 = sadd.s32 %s735, 72
        %s746 = scalar_lea.vmem [#allocation2], %s745
        %v747 = vld [vmem:[%s746] sm:$0xff]
        %v748 = vld [vmem:[%s746 + $0x8] sm:$0xff]
        %v749 = vld [vmem:[%s746 + $0x10] sm:$0xff]
        %v750 = vld [vmem:[%s746 + $0x18] sm:$0xff]
        %v751 = vld [vmem:[%s746 + $0x20] sm:$0xff]
        %v752 = vld [vmem:[%s746 + $0x28] sm:$0xff]
        %v753 = vld [vmem:[%s746 + $0x30] sm:$0xff]
        %v754 = vld [vmem:[%s746 + $0x38] sm:$0xff]
        %v755 = vld [vmem:[#allocation2 + $0x4] sm:$0xff]
        %v756 = vld [vmem:[#allocation2 + $0xc] sm:$0xff]
        %v757 = vld [vmem:[#allocation2 + $0x14] sm:$0xff]
        %v758 = vld [vmem:[#allocation2 + $0x1c] sm:$0xff]
        %v759 = vld [vmem:[#allocation2 + $0x24] sm:$0xff]
        %v760 = vld [vmem:[#allocation2 + $0x2c] sm:$0xff]
        %v761 = vld [vmem:[#allocation2 + $0x34] sm:$0xff]
        %v762 = vld [vmem:[#allocation2 + $0x3c] sm:$0xff]
        %v763 = vld [vmem:[#allocation2 + $0x4c] sm:$0xff]
        %v764 = vld [vmem:[#allocation2 + $0x54] sm:$0xff]
        %v765 = vld [vmem:[#allocation2 + $0x5c] sm:$0xff]
        %v766 = vld [vmem:[#allocation2 + $0x64] sm:$0xff]
        %v767 = vld [vmem:[#allocation2 + $0x6c] sm:$0xff]
        %v768 = vld [vmem:[#allocation2 + $0x74] sm:$0xff]
        %v769 = vld [vmem:[#allocation2 + $0x7c] sm:$0xff]
        %v770 = vld [vmem:[#allocation2 + $0x84] sm:$0xff]
        %s771 = sadd.s32 %s734, 4
        %s772 = scalar_lea.vmem [#allocation2], %s771
        %v773 = vld [vmem:[%s772] sm:$0xff]
        %v774 = vld [vmem:[%s772 + $0x8] sm:$0xff]
        %v775 = vld [vmem:[%s772 + $0x10] sm:$0xff]
        %v776 = vld [vmem:[%s772 + $0x18] sm:$0xff]
        %v777 = vld [vmem:[%s772 + $0x20] sm:$0xff]
        %v778 = vld [vmem:[%s772 + $0x28] sm:$0xff]
        %v779 = vld [vmem:[%s772 + $0x30] sm:$0xff]
        %v780 = vld [vmem:[%s772 + $0x38] sm:$0xff]
        %s781 = sadd.s32 %s771, 72
        %s782 = scalar_lea.vmem [#allocation2], %s781
        %v783 = vld [vmem:[%s782] sm:$0xff]
        %v784 = vld [vmem:[%s782 + $0x8] sm:$0xff]
        %v785 = vld [vmem:[%s782 + $0x10] sm:$0xff]
        %v786 = vld [vmem:[%s782 + $0x18] sm:$0xff]
        %v787 = vld [vmem:[%s782 + $0x20] sm:$0xff]
        %v788 = vld [vmem:[%s782 + $0x28] sm:$0xff]
        %v789 = vld [vmem:[%s782 + $0x30] sm:$0xff]
        %v790 = vld [vmem:[%s782 + $0x38] sm:$0xff]
        %v791 = vld [vmem:[%s442] sm:$0xff]
        %v792 = vld [vmem:[%s442 + $0x8] sm:$0xff]
        %v793 = vld [vmem:[%s442 + $0x10] sm:$0xff]
        %v794 = vld [vmem:[%s442 + $0x18] sm:$0xff]
        %v795 = vld [vmem:[%s442 + $0x20] sm:$0xff]
        %v796 = vld [vmem:[%s442 + $0x28] sm:$0xff]
        %v797 = vld [vmem:[%s442 + $0x30] sm:$0xff]
        %v798 = vld [vmem:[%s442 + $0x38] sm:$0xff]
        %v799 = vld [vmem:[%s442 + $0x40] sm:$0xff]
        %v800 = vld [vmem:[%s442 + $0x48] sm:$0xff]
        %v801 = vld [vmem:[%s442 + $0x50] sm:$0xff]
        %v802 = vld [vmem:[%s442 + $0x58] sm:$0xff]
        %v803 = vld [vmem:[%s442 + $0x60] sm:$0xff]
        %v804 = vld [vmem:[%s442 + $0x68] sm:$0xff]
        %v805 = vld [vmem:[%s442 + $0x70] sm:$0xff]
        %v806 = vld [vmem:[%s442 + $0x78] sm:$0xff]
        %v807 = vld [vmem:[%s442 + $0x80] sm:$0xff]
        %v808 = vld [vmem:[%s442 + $0x88] sm:$0xff]
        %v809 = vld [vmem:[%s442 + $0x90] sm:$0xff]
        %v810 = vld [vmem:[%s442 + $0x98] sm:$0xff]
        %v811 = vld [vmem:[%s442 + $0xa0] sm:$0xff]
        %v812 = vld [vmem:[%s442 + $0xa8] sm:$0xff]
        %v813 = vld [vmem:[%s442 + $0xb0] sm:$0xff]
        %v814 = vld [vmem:[%s442 + $0xb8] sm:$0xff]
        %v815 = vld [vmem:[%s442 + $0xc0] sm:$0xff]
        %v816 = vld [vmem:[%s442 + $0xc8] sm:$0xff]
        %v817 = vld [vmem:[%s442 + $0xd0] sm:$0xff]
        %v818 = vld [vmem:[%s442 + $0xd8] sm:$0xff]
        %v819 = vld [vmem:[%s442 + $0xe0] sm:$0xff]
        %v820 = vld [vmem:[%s442 + $0xe8] sm:$0xff]
        %v821 = vld [vmem:[%s442 + $0xf0] sm:$0xff]
        %v822 = vld [vmem:[%s442 + $0xf8] sm:$0xff]
        %v823 = vld [vmem:[%s442 + $0x100] sm:$0xff]
        %v824 = vld [vmem:[%s442 + $0x108] sm:$0xff]
        %v825 = vld [vmem:[%s442 + $0x110] sm:$0xff]
        %v826 = vld [vmem:[%s442 + $0x118] sm:$0xff]
        %v827 = vld [vmem:[%s442 + $0x120] sm:$0xff]
        %v828 = vld [vmem:[%s442 + $0x128] sm:$0xff]
        %v829 = vld [vmem:[%s442 + $0x130] sm:$0xff]
        %v830 = vld [vmem:[%s442 + $0x138] sm:$0xff]
        %v831 = vld [vmem:[%s442 + $0x140] sm:$0xff]
        %v832 = vld [vmem:[%s442 + $0x148] sm:$0xff]
        %v833 = vld [vmem:[%s442 + $0x150] sm:$0xff]
        %v834 = vld [vmem:[%s442 + $0x158] sm:$0xff]
        %v835 = vld [vmem:[%s442 + $0x160] sm:$0xff]
        %v836 = vld [vmem:[%s442 + $0x168] sm:$0xff]
        %v837 = vld [vmem:[%s442 + $0x170] sm:$0xff]
        %v838 = vld [vmem:[%s442 + $0x178] sm:$0xff]
        %v839 = vld [vmem:[%s442 + $0x180] sm:$0xff]
        %v840 = vld [vmem:[%s442 + $0x188] sm:$0xff]
        %v841 = vld [vmem:[%s442 + $0x190] sm:$0xff]
        %v842 = vld [vmem:[%s442 + $0x198] sm:$0xff]
        %v843 = vld [vmem:[%s442 + $0x1a0] sm:$0xff]
        %v844 = vld [vmem:[%s442 + $0x1a8] sm:$0xff]
        %v845 = vld [vmem:[%s442 + $0x1b0] sm:$0xff]
        %v846 = vld [vmem:[%s442 + $0x1b8] sm:$0xff]
        %v847 = vld [vmem:[%s442 + $0x1c0] sm:$0xff]
        %v848 = vld [vmem:[%s442 + $0x1c8] sm:$0xff]
        %v849 = vld [vmem:[%s442 + $0x1d0] sm:$0xff]
        %v850 = vld [vmem:[%s442 + $0x1d8] sm:$0xff]
        %v851 = vld [vmem:[%s442 + $0x1e0] sm:$0xff]
        %v852 = vld [vmem:[%s442 + $0x1e8] sm:$0xff]
        %v853 = vld [vmem:[%s442 + $0x1f0] sm:$0xff]
        %v854 = vld [vmem:[%s442 + $0x1f8] sm:$0xff]
        %v855 = vld [vmem:[%s442 + $0x200] sm:$0xff]
        %v856 = vld [vmem:[%s442 + $0x208] sm:$0xff]
        %v857 = vld [vmem:[%s442 + $0x210] sm:$0xff]
        %v858 = vld [vmem:[%s442 + $0x218] sm:$0xff]
        %v859 = vld [vmem:[%s442 + $0x220] sm:$0xff]
        %v860 = vld [vmem:[%s442 + $0x228] sm:$0xff]
        %v861 = vld [vmem:[%s442 + $0x230] sm:$0xff]
        %v862 = vld [vmem:[%s442 + $0x238] sm:$0xff]
        %v863 = vld [vmem:[%s442 + $0x240] sm:$0xff]
        %v864 = vld [vmem:[%s442 + $0x248] sm:$0xff]
        %v865 = vld [vmem:[%s442 + $0x250] sm:$0xff]
        %v866 = vld [vmem:[%s442 + $0x258] sm:$0xff]
        %v867 = vld [vmem:[%s442 + $0x260] sm:$0xff]
        %v868 = vld [vmem:[%s442 + $0x268] sm:$0xff]
        %v869 = vld [vmem:[%s442 + $0x270] sm:$0xff]
        %v870 = vld [vmem:[%s442 + $0x278] sm:$0xff]
        %v871 = vld [vmem:[%s442 + $0x280] sm:$0xff]
        %v872 = vld [vmem:[%s442 + $0x288] sm:$0xff]
        %v873 = vld [vmem:[%s442 + $0x290] sm:$0xff]
        %v874 = vld [vmem:[%s442 + $0x298] sm:$0xff]
        %v875 = vld [vmem:[%s442 + $0x2a0] sm:$0xff]
        %v876 = vld [vmem:[%s442 + $0x2a8] sm:$0xff]
        %v877 = vld [vmem:[%s442 + $0x2b0] sm:$0xff]
        %v878 = vld [vmem:[%s442 + $0x2b8] sm:$0xff]
        %v879 = vld [vmem:[%s442 + $0x2c0] sm:$0xff]
        %v880 = vld [vmem:[%s442 + $0x2c8] sm:$0xff]
        %v881 = vld [vmem:[%s442 + $0x2d0] sm:$0xff]
        %v882 = vld [vmem:[%s442 + $0x2d8] sm:$0xff]
        %v883 = vld [vmem:[%s442 + $0x2e0] sm:$0xff]
        %v884 = vld [vmem:[%s442 + $0x2e8] sm:$0xff]
        %v885 = vld [vmem:[%s442 + $0x2f0] sm:$0xff]
        %v886 = vld [vmem:[%s442 + $0x2f8] sm:$0xff]
        %v887 = vld [vmem:[%s451] sm:$0x3]
        %v889 = vlaneseq
        %v890 = vshrl.u32 %v889, 7
        %v891 = vsub.s32 0, %v890
        %v892 = vrot.slane %v887, %v891
        %v893 = vlaneseq
        %v894 = vshrl.u32 %v893, 7
        %v895 = vsub.s32 1, %v894
        %v896 = vrot.slane %v887, %v895
        %899 = vmatprep.subr.mxu0 %v822
        %900 = vmatpush1.msra.mxu0 %v821
        %901 = vmatprep.subr.mxu0 %v820
        %902 = vmatpush1.msra.mxu0 %v819
        %903 = vmatprep.subr.mxu0 %v818
        %904 = vmatpush1.msra.mxu0 %v817
        %905 = vmatprep.subr.mxu0 %v816
        %906 = vmatpush1.msra.mxu0 %v815
        %907 = vmatprep.subr.mxu0 %v814
        %908 = vmatpush1.msra.mxu0 %v813
        %909 = vmatprep.subr.mxu0 %v812
        %910 = vmatpush1.msra.mxu0 %v811
        %911 = vmatprep.subr.mxu0 %v810
        %912 = vmatpush1.msra.mxu0 %v809
        %913 = vmatprep.subr.mxu0 %v808
        %914 = vmatpush1.msra.mxu0 %v807
        %915 = vmatprep.subr.mxu0 %v806
        %916 = vmatpush1.msra.mxu0 %v805
        %917 = vmatprep.subr.mxu0 %v804
        %918 = vmatpush1.msra.mxu0 %v803
        %919 = vmatprep.subr.mxu0 %v802
        %920 = vmatpush1.msra.mxu0 %v801
        %921 = vmatprep.subr.mxu0 %v800
        %922 = vmatpush1.msra.mxu0 %v799
        %923 = vmatprep.subr.mxu0 %v798
        %924 = vmatpush1.msra.mxu0 %v797
        %925 = vmatprep.subr.mxu0 %v796
        %926 = vmatpush1.msra.mxu0 %v795
        %927 = vmatprep.subr.mxu0 %v794
        %928 = vmatpush1.msra.mxu0 %v793
        %929 = vmatprep.subr.mxu0 %v792
        %930 = vmatpush1.msra.mxu0 %v791
        %931 = vmatprep.subr.mxu0 %v854
        %932 = vmatpush2.msra.mxu0 %v853
        %933 = vmatprep.subr.mxu0 %v852
        %934 = vmatpush2.msra.mxu0 %v851
        %935 = vmatprep.subr.mxu0 %v850
        %936 = vmatpush2.msra.mxu0 %v849
        %937 = vmatprep.subr.mxu0 %v848
        %938 = vmatpush2.msra.mxu0 %v847
        %939 = vmatprep.subr.mxu0 %v846
        %940 = vmatpush2.msra.mxu0 %v845
        %941 = vmatprep.subr.mxu0 %v844
        %942 = vmatpush2.msra.mxu0 %v843
        %943 = vmatprep.subr.mxu0 %v842
        %944 = vmatpush2.msra.mxu0 %v841
        %945 = vmatprep.subr.mxu0 %v840
        %946 = vmatpush2.msra.mxu0 %v839
        %947 = vmatprep.subr.mxu0 %v838
        %948 = vmatpush2.msra.mxu0 %v837
        %949 = vmatprep.subr.mxu0 %v836
        %950 = vmatpush2.msra.mxu0 %v835
        %951 = vmatprep.subr.mxu0 %v834
        %952 = vmatpush2.msra.mxu0 %v833
        %953 = vmatprep.subr.mxu0 %v832
        %954 = vmatpush2.msra.mxu0 %v831
        %955 = vmatprep.subr.mxu0 %v830
        %956 = vmatpush2.msra.mxu0 %v829
        %957 = vmatprep.subr.mxu0 %v828
        %958 = vmatpush2.msra.mxu0 %v827
        %959 = vmatprep.subr.mxu0 %v826
        %960 = vmatpush2.msra.mxu0 %v825
        %961 = vmatprep.subr.mxu0 %v824
        %962 = vmatpush2.msra.mxu0 %v823
        %963 = vmatprep.mubr.f32.mxu0 %v755
        %964 = vmatmul.mubr.f32.gmra.mxu0 %v737
        %v965 = vpop.f32.mrf.mxu0
        %v966 = vadd.f32 %v892, %v965
        %v967 = vpop.f32.mrf.mxu0
        %v968 = vadd.f32 %v896, %v967
        %969 = vmatprep.mubr.f32.mxu0 %v756
        %970 = vmatmul.mubr.f32.gmra.mxu0 %v738
        %v971 = vpop.f32.mrf.mxu0
        %v972 = vadd.f32 %v892, %v971
        %v973 = vpop.f32.mrf.mxu0
        %v974 = vadd.f32 %v896, %v973
        %975 = vmatprep.mubr.f32.mxu0 %v757
        %976 = vmatmul.mubr.f32.gmra.mxu0 %v739
        %v977 = vpop.f32.mrf.mxu0
        %v978 = vadd.f32 %v892, %v977
        %v979 = vpop.f32.mrf.mxu0
        %v980 = vadd.f32 %v896, %v979
        %981 = vmatprep.mubr.f32.mxu0 %v758
        %982 = vmatmul.mubr.f32.gmra.mxu0 %v740
        %v983 = vpop.f32.mrf.mxu0
        %v984 = vadd.f32 %v892, %v983
        %v985 = vpop.f32.mrf.mxu0
        %v986 = vadd.f32 %v896, %v985
        %987 = vmatprep.mubr.f32.mxu0 %v759
        %988 = vmatmul.mubr.f32.gmra.mxu0 %v741
        %v989 = vpop.f32.mrf.mxu0
        %v990 = vadd.f32 %v892, %v989
        %v991 = vpop.f32.mrf.mxu0
        %v992 = vadd.f32 %v896, %v991
        %993 = vmatprep.mubr.f32.mxu0 %v760
        %994 = vmatmul.mubr.f32.gmra.mxu0 %v742
        %v995 = vpop.f32.mrf.mxu0
        %v996 = vadd.f32 %v892, %v995
        %v997 = vpop.f32.mrf.mxu0
        %v998 = vadd.f32 %v896, %v997
        %999 = vmatprep.mubr.f32.mxu0 %v761
        %1000 = vmatmul.mubr.f32.gmra.mxu0 %v743
        %v1001 = vpop.f32.mrf.mxu0
        %v1002 = vadd.f32 %v892, %v1001
        %v1003 = vpop.f32.mrf.mxu0
        %v1004 = vadd.f32 %v896, %v1003
        %1005 = vmatprep.mubr.f32.mxu0 %v762
        %1006 = vmatmul.mubr.f32.gmra.mxu0 %v744
        %v1007 = vpop.f32.mrf.mxu0
        %v1008 = vadd.f32 %v892, %v1007
        %v1009 = vpop.f32.mrf.mxu0
        %v1010 = vadd.f32 %v896, %v1009
        %1011 = vmatprep.mubr.f32.mxu0 %v763
        %1012 = vmatmul.mubr.f32.gmra.mxu0 %v747
        %v1013 = vpop.f32.mrf.mxu0
        %v1014 = vadd.f32 %v892, %v1013
        %v1015 = vpop.f32.mrf.mxu0
        %v1016 = vadd.f32 %v896, %v1015
        %1017 = vmatprep.mubr.f32.mxu0 %v764
        %1018 = vmatmul.mubr.f32.gmra.mxu0 %v748
        %v1019 = vpop.f32.mrf.mxu0
        %v1020 = vadd.f32 %v892, %v1019
        %v1021 = vpop.f32.mrf.mxu0
        %v1022 = vadd.f32 %v896, %v1021
        %1023 = vmatprep.mubr.f32.mxu0 %v765
        %1024 = vmatmul.mubr.f32.gmra.mxu0 %v749
        %v1025 = vpop.f32.mrf.mxu0
        %v1026 = vadd.f32 %v892, %v1025
        %v1027 = vpop.f32.mrf.mxu0
        %v1028 = vadd.f32 %v896, %v1027
        %1029 = vmatprep.mubr.f32.mxu0 %v766
        %1030 = vmatmul.mubr.f32.gmra.mxu0 %v750
        %v1031 = vpop.f32.mrf.mxu0
        %v1032 = vadd.f32 %v892, %v1031
        %v1033 = vpop.f32.mrf.mxu0
        %v1034 = vadd.f32 %v896, %v1033
        %1035 = vmatprep.mubr.f32.mxu0 %v767
        %1036 = vmatmul.mubr.f32.gmra.mxu0 %v751
        %v1037 = vpop.f32.mrf.mxu0
        %v1038 = vadd.f32 %v892, %v1037
        %v1039 = vpop.f32.mrf.mxu0
        %v1040 = vadd.f32 %v896, %v1039
        %1041 = vmatprep.mubr.f32.mxu0 %v768
        %1042 = vmatmul.mubr.f32.gmra.mxu0 %v752
        %v1043 = vpop.f32.mrf.mxu0
        %v1044 = vadd.f32 %v892, %v1043
        %v1045 = vpop.f32.mrf.mxu0
        %v1046 = vadd.f32 %v896, %v1045
        %1047 = vmatprep.mubr.f32.mxu0 %v769
        %1048 = vmatmul.mubr.f32.gmra.mxu0 %v753
        %v1049 = vpop.f32.mrf.mxu0
        %v1050 = vadd.f32 %v892, %v1049
        %v1051 = vpop.f32.mrf.mxu0
        %v1052 = vadd.f32 %v896, %v1051
        %1053 = vmatprep.mubr.f32.mxu0 %v770
        %1054 = vmatmul.mubr.f32.gmra.mxu0 %v754
        %v1055 = vpop.f32.mrf.mxu0
        %v1056 = vadd.f32 %v892, %v1055
        %v1057 = vpop.f32.mrf.mxu0
        %v1058 = vadd.f32 %v896, %v1057
        %1059 = vdwg.mxu0
        %1060 = vmatprep.subr.mxu0 %v886
        %1061 = vmatpush1.msra.mxu0 %v885
        %1062 = vmatprep.subr.mxu0 %v884
        %1063 = vmatpush1.msra.mxu0 %v883
        %1064 = vmatprep.subr.mxu0 %v882
        %1065 = vmatpush1.msra.mxu0 %v881
        %1066 = vmatprep.subr.mxu0 %v880
        %1067 = vmatpush1.msra.mxu0 %v879
        %1068 = vmatprep.subr.mxu0 %v878
        %1069 = vmatpush1.msra.mxu0 %v877
        %1070 = vmatprep.subr.mxu0 %v876
        %1071 = vmatpush1.msra.mxu0 %v875
        %1072 = vmatprep.subr.mxu0 %v874
        %1073 = vmatpush1.msra.mxu0 %v873
        %1074 = vmatprep.subr.mxu0 %v872
        %1075 = vmatpush1.msra.mxu0 %v871
        %1076 = vmatprep.subr.mxu0 %v870
        %1077 = vmatpush1.msra.mxu0 %v869
        %1078 = vmatprep.subr.mxu0 %v868
        %1079 = vmatpush1.msra.mxu0 %v867
        %1080 = vmatprep.subr.mxu0 %v866
        %1081 = vmatpush1.msra.mxu0 %v865
        %1082 = vmatprep.subr.mxu0 %v864
        %1083 = vmatpush1.msra.mxu0 %v863
        %1084 = vmatprep.subr.mxu0 %v862
        %1085 = vmatpush1.msra.mxu0 %v861
        %1086 = vmatprep.subr.mxu0 %v860
        %1087 = vmatpush1.msra.mxu0 %v859
        %1088 = vmatprep.subr.mxu0 %v858
        %1089 = vmatpush1.msra.mxu0 %v857
        %1090 = vmatprep.subr.mxu0 %v856
        %1091 = vmatpush1.msra.mxu0 %v855
        %1092 = vmatprep.subr.mxu0 0.0
        %1093 = vmatpush2.msra.mxu0 0.0
        %1094 = vmatprep.subr.mxu0 0.0
        %1095 = vmatpush2.msra.mxu0 0.0
        %1096 = vmatprep.subr.mxu0 0.0
        %1097 = vmatpush2.msra.mxu0 0.0
        %1098 = vmatprep.subr.mxu0 0.0
        %1099 = vmatpush2.msra.mxu0 0.0
        %1100 = vmatprep.subr.mxu0 0.0
        %1101 = vmatpush2.msra.mxu0 0.0
        %1102 = vmatprep.subr.mxu0 0.0
        %1103 = vmatpush2.msra.mxu0 0.0
        %1104 = vmatprep.subr.mxu0 0.0
        %1105 = vmatpush2.msra.mxu0 0.0
        %1106 = vmatprep.subr.mxu0 0.0
        %1107 = vmatpush2.msra.mxu0 0.0
        %1108 = vmatprep.subr.mxu0 0.0
        %1109 = vmatpush2.msra.mxu0 0.0
        %1110 = vmatprep.subr.mxu0 0.0
        %1111 = vmatpush2.msra.mxu0 0.0
        %1112 = vmatprep.subr.mxu0 0.0
        %1113 = vmatpush2.msra.mxu0 0.0
        %1114 = vmatprep.subr.mxu0 0.0
        %1115 = vmatpush2.msra.mxu0 0.0
        %1116 = vmatprep.subr.mxu0 0.0
        %1117 = vmatpush2.msra.mxu0 0.0
        %1118 = vmatprep.subr.mxu0 0.0
        %1119 = vmatpush2.msra.mxu0 0.0
        %1120 = vmatprep.subr.mxu0 0.0
        %1121 = vmatpush2.msra.mxu0 0.0
        %1122 = vmatprep.subr.mxu0 0.0
        %1123 = vmatpush2.msra.mxu0 0.0
        %1124 = vmatprep.mubr.f32.mxu0 0.0
        %1125 = vmatmul.mubr.f32.gmra.mxu0 %v773
        %v1126 = vpop.f32.mrf.mxu0
        %v1127 = vadd.f32 %v966, %v1126
        %v1128 = vpop.f32.mrf.mxu0
        %v1129 = vadd.f32 %v968, %v1128
        %1130 = vmatprep.mubr.f32.mxu0 0.0
        %1131 = vmatmul.mubr.f32.gmra.mxu0 %v774
        %v1132 = vpop.f32.mrf.mxu0
        %v1133 = vadd.f32 %v972, %v1132
        %v1134 = vpop.f32.mrf.mxu0
        %v1135 = vadd.f32 %v974, %v1134
        %1136 = vmatprep.mubr.f32.mxu0 0.0
        %1137 = vmatmul.mubr.f32.gmra.mxu0 %v775
        %v1138 = vpop.f32.mrf.mxu0
        %v1139 = vadd.f32 %v978, %v1138
        %v1140 = vpop.f32.mrf.mxu0
        %v1141 = vadd.f32 %v980, %v1140
        %1142 = vmatprep.mubr.f32.mxu0 0.0
        %1143 = vmatmul.mubr.f32.gmra.mxu0 %v776
        %v1144 = vpop.f32.mrf.mxu0
        %v1145 = vadd.f32 %v984, %v1144
        %v1146 = vpop.f32.mrf.mxu0
        %v1147 = vadd.f32 %v986, %v1146
        %1148 = vmatprep.mubr.f32.mxu0 0.0
        %1149 = vmatmul.mubr.f32.gmra.mxu0 %v777
        %v1150 = vpop.f32.mrf.mxu0
        %v1151 = vadd.f32 %v990, %v1150
        %v1152 = vpop.f32.mrf.mxu0
        %v1153 = vadd.f32 %v992, %v1152
        %1154 = vmatprep.mubr.f32.mxu0 0.0
        %1155 = vmatmul.mubr.f32.gmra.mxu0 %v778
        %v1156 = vpop.f32.mrf.mxu0
        %v1157 = vadd.f32 %v996, %v1156
        %v1158 = vpop.f32.mrf.mxu0
        %v1159 = vadd.f32 %v998, %v1158
        %1160 = vmatprep.mubr.f32.mxu0 0.0
        %1161 = vmatmul.mubr.f32.gmra.mxu0 %v779
        %v1162 = vpop.f32.mrf.mxu0
        %v1163 = vadd.f32 %v1002, %v1162
        %v1164 = vpop.f32.mrf.mxu0
        %v1165 = vadd.f32 %v1004, %v1164
        %1166 = vmatprep.mubr.f32.mxu0 0.0
        %1167 = vmatmul.mubr.f32.gmra.mxu0 %v780
        %v1168 = vpop.f32.mrf.mxu0
        %v1169 = vadd.f32 %v1008, %v1168
        %v1170 = vpop.f32.mrf.mxu0
        %v1171 = vadd.f32 %v1010, %v1170
        %1172 = vmatprep.mubr.f32.mxu0 0.0
        %1173 = vmatmul.mubr.f32.gmra.mxu0 %v783
        %v1174 = vpop.f32.mrf.mxu0
        %v1175 = vadd.f32 %v1014, %v1174
        %v1176 = vpop.f32.mrf.mxu0
        %v1177 = vadd.f32 %v1016, %v1176
        %1178 = vmatprep.mubr.f32.mxu0 0.0
        %1179 = vmatmul.mubr.f32.gmra.mxu0 %v784
        %v1180 = vpop.f32.mrf.mxu0
        %v1181 = vadd.f32 %v1020, %v1180
        %v1182 = vpop.f32.mrf.mxu0
        %v1183 = vadd.f32 %v1022, %v1182
        %1184 = vmatprep.mubr.f32.mxu0 0.0
        %1185 = vmatmul.mubr.f32.gmra.mxu0 %v785
        %v1186 = vpop.f32.mrf.mxu0
        %v1187 = vadd.f32 %v1026, %v1186
        %v1188 = vpop.f32.mrf.mxu0
        %v1189 = vadd.f32 %v1028, %v1188
        %1190 = vmatprep.mubr.f32.mxu0 0.0
        %1191 = vmatmul.mubr.f32.gmra.mxu0 %v786
        %v1192 = vpop.f32.mrf.mxu0
        %v1193 = vadd.f32 %v1032, %v1192
        %v1194 = vpop.f32.mrf.mxu0
        %v1195 = vadd.f32 %v1034, %v1194
        %1196 = vmatprep.mubr.f32.mxu0 0.0
        %1197 = vmatmul.mubr.f32.gmra.mxu0 %v787
        %v1198 = vpop.f32.mrf.mxu0
        %v1199 = vadd.f32 %v1038, %v1198
        %v1200 = vpop.f32.mrf.mxu0
        %v1201 = vadd.f32 %v1040, %v1200
        %1202 = vmatprep.mubr.f32.mxu0 0.0
        %1203 = vmatmul.mubr.f32.gmra.mxu0 %v788
        %v1204 = vpop.f32.mrf.mxu0
        %v1205 = vadd.f32 %v1044, %v1204
        %v1206 = vpop.f32.mrf.mxu0
        %v1207 = vadd.f32 %v1046, %v1206
        %1208 = vmatprep.mubr.f32.mxu0 0.0
        %1209 = vmatmul.mubr.f32.gmra.mxu0 %v789
        %v1210 = vpop.f32.mrf.mxu0
        %v1211 = vadd.f32 %v1050, %v1210
        %v1212 = vpop.f32.mrf.mxu0
        %v1213 = vadd.f32 %v1052, %v1212
        %1214 = vmatprep.mubr.f32.mxu0 0.0
        %1215 = vmatmul.mubr.f32.gmra.mxu0 %v790
        %v1216 = vpop.f32.mrf.mxu0
        %v1217 = vadd.f32 %v1056, %v1216
        %v1218 = vpop.f32.mrf.mxu0
        %v1219 = vadd.f32 %v1058, %v1218
        %1220 = vdwg.mxu0
        %v1221 = vxor.u32 %v1127, 2147483648
        %v1222 = vxor.u32 %v1133, 2147483648
        %v1223 = vxor.u32 %v1139, 2147483648
        %v1224 = vxor.u32 %v1145, 2147483648
        %v1225 = vxor.u32 %v1151, 2147483648
        %v1226 = vxor.u32 %v1157, 2147483648
        %v1227 = vxor.u32 %v1163, 2147483648
        %v1228 = vxor.u32 %v1169, 2147483648
        %v1229 = vxor.u32 %v1175, 2147483648
        %v1230 = vxor.u32 %v1181, 2147483648
        %v1231 = vxor.u32 %v1187, 2147483648
        %v1232 = vxor.u32 %v1193, 2147483648
        %v1233 = vxor.u32 %v1199, 2147483648
        %v1234 = vxor.u32 %v1205, 2147483648
        %v1235 = vxor.u32 %v1211, 2147483648
        %v1236 = vxor.u32 %v1217, 2147483648
        %v1237 = vmul.f32 %v1221, 1.442695
        %v1238 = vpow.pop %v1237
        %v1239 = vmul.f32 %v1222, 1.442695
        %v1240 = vpow.pop %v1239
        %v1241 = vmul.f32 %v1223, 1.442695
        %v1242 = vpow.pop %v1241
        %v1243 = vmul.f32 %v1224, 1.442695
        %v1244 = vpow.pop %v1243
        %v1245 = vmul.f32 %v1225, 1.442695
        %v1246 = vpow.pop %v1245
        %v1247 = vmul.f32 %v1226, 1.442695
        %v1248 = vpow.pop %v1247
        %v1249 = vmul.f32 %v1227, 1.442695
        %v1250 = vpow.pop %v1249
        %v1251 = vmul.f32 %v1228, 1.442695
        %v1252 = vpow.pop %v1251
        %v1253 = vmul.f32 %v1229, 1.442695
        %v1254 = vpow.pop %v1253
        %v1255 = vmul.f32 %v1230, 1.442695
        %v1256 = vpow.pop %v1255
        %v1257 = vmul.f32 %v1231, 1.442695
        %v1258 = vpow.pop %v1257
        %v1259 = vmul.f32 %v1232, 1.442695
        %v1260 = vpow.pop %v1259
        %v1261 = vmul.f32 %v1233, 1.442695
        %v1262 = vpow.pop %v1261
        %v1263 = vmul.f32 %v1234, 1.442695
        %v1264 = vpow.pop %v1263
        %v1265 = vmul.f32 %v1235, 1.442695
        %v1266 = vpow.pop %v1265
        %v1267 = vmul.f32 %v1236, 1.442695
        %v1268 = vpow.pop %v1267
        %v1269 = vadd.f32 %v1238, 1.0
        %v1270 = vadd.f32 %v1240, 1.0
        %v1271 = vadd.f32 %v1242, 1.0
        %v1272 = vadd.f32 %v1244, 1.0
        %v1273 = vadd.f32 %v1246, 1.0
        %v1274 = vadd.f32 %v1248, 1.0
        %v1275 = vadd.f32 %v1250, 1.0
        %v1276 = vadd.f32 %v1252, 1.0
        %v1277 = vadd.f32 %v1254, 1.0
        %v1278 = vadd.f32 %v1256, 1.0
        %v1279 = vadd.f32 %v1258, 1.0
        %v1280 = vadd.f32 %v1260, 1.0
        %v1281 = vadd.f32 %v1262, 1.0
        %v1282 = vadd.f32 %v1264, 1.0
        %v1283 = vadd.f32 %v1266, 1.0
        %v1284 = vadd.f32 %v1268, 1.0
        %v1285 = vrcp.pop %v1269
        %v1286 = vmul.f32 1.0, %v1285
        %v1287 = vrcp.pop %v1270
        %v1288 = vmul.f32 1.0, %v1287
        %v1289 = vrcp.pop %v1271
        %v1290 = vmul.f32 1.0, %v1289
        %v1291 = vrcp.pop %v1272
        %v1292 = vmul.f32 1.0, %v1291
        %v1293 = vrcp.pop %v1273
        %v1294 = vmul.f32 1.0, %v1293
        %v1295 = vrcp.pop %v1274
        %v1296 = vmul.f32 1.0, %v1295
        %v1297 = vrcp.pop %v1275
        %v1298 = vmul.f32 1.0, %v1297
        %v1299 = vrcp.pop %v1276
        %v1300 = vmul.f32 1.0, %v1299
        %v1301 = vrcp.pop %v1277
        %v1302 = vmul.f32 1.0, %v1301
        %v1303 = vrcp.pop %v1278
        %v1304 = vmul.f32 1.0, %v1303
        %v1305 = vrcp.pop %v1279
        %v1306 = vmul.f32 1.0, %v1305
        %v1307 = vrcp.pop %v1280
        %v1308 = vmul.f32 1.0, %v1307
        %v1309 = vrcp.pop %v1281
        %v1310 = vmul.f32 1.0, %v1309
        %v1311 = vrcp.pop %v1282
        %v1312 = vmul.f32 1.0, %v1311
        %v1313 = vrcp.pop %v1283
        %v1314 = vmul.f32 1.0, %v1313
        %v1315 = vrcp.pop %v1284
        %v1316 = vmul.f32 1.0, %v1315
        %v1317 = vtanh.pop %v1129
        %v1318 = vtanh.pop %v1135
        %v1319 = vtanh.pop %v1141
        %v1320 = vtanh.pop %v1147
        %v1321 = vtanh.pop %v1153
        %v1322 = vtanh.pop %v1159
        %v1323 = vtanh.pop %v1165
        %v1324 = vtanh.pop %v1171
        %v1325 = vtanh.pop %v1177
        %v1326 = vtanh.pop %v1183
        %v1327 = vtanh.pop %v1189
        %v1328 = vtanh.pop %v1195
        %v1329 = vtanh.pop %v1201
        %v1330 = vtanh.pop %v1207
        %v1331 = vtanh.pop %v1213
        %v1332 = vtanh.pop %v1219
        %v1333 = vmul.f32 %v1286, %v1317
        %v1334 = vmul.f32 %v1288, %v1318
        %v1335 = vmul.f32 %v1290, %v1319
        %v1336 = vmul.f32 %v1292, %v1320
        %v1337 = vmul.f32 %v1294, %v1321
        %v1338 = vmul.f32 %v1296, %v1322
        %v1339 = vmul.f32 %v1298, %v1323
        %v1340 = vmul.f32 %v1300, %v1324
        %v1341 = vmul.f32 %v1302, %v1325
        %v1342 = vmul.f32 %v1304, %v1326
        %v1343 = vmul.f32 %v1306, %v1327
        %v1344 = vmul.f32 %v1308, %v1328
        %v1345 = vmul.f32 %v1310, %v1329
        %v1346 = vmul.f32 %v1312, %v1330
        %v1347 = vmul.f32 %v1314, %v1331
        %v1348 = vmul.f32 %v1316, %v1332
        %v1349 = vld [vmem:[%s460] sm:$0xff]
        %v1350 = vld [vmem:[%s460 + $0x8] sm:$0xff]
        %v1351 = vld [vmem:[%s460 + $0x10] sm:$0xff]
        %v1352 = vld [vmem:[%s460 + $0x18] sm:$0xff]
        %v1353 = vld [vmem:[%s460 + $0x20] sm:$0xff]
        %v1354 = vld [vmem:[%s460 + $0x28] sm:$0xff]
        %v1355 = vld [vmem:[%s460 + $0x30] sm:$0xff]
        %v1356 = vld [vmem:[%s460 + $0x38] sm:$0xff]
        %v1357 = vld [vmem:[%s460 + $0x40] sm:$0xff]
        %v1358 = vld [vmem:[%s460 + $0x48] sm:$0xff]
        %v1359 = vld [vmem:[%s460 + $0x50] sm:$0xff]
        %v1360 = vld [vmem:[%s460 + $0x58] sm:$0xff]
        %v1361 = vld [vmem:[%s460 + $0x60] sm:$0xff]
        %v1362 = vld [vmem:[%s460 + $0x68] sm:$0xff]
        %v1363 = vld [vmem:[%s460 + $0x70] sm:$0xff]
        %v1364 = vld [vmem:[%s460 + $0x78] sm:$0xff]
        %v1365 = vld [vmem:[%s468] sm:$0x1]
        %v1367 = vlaneseq
        %v1368 = vshrl.u32 %v1367, 7
        %v1369 = vsub.s32 0, %v1368
        %v1370 = vrot.slane %v1365, %v1369
        %1372 = vmatprep.subr.mxu0 0.0
        %1373 = vmatpush1.msra.mxu0 %v1364
        %1374 = vmatprep.subr.mxu0 0.0
        %1375 = vmatpush1.msra.mxu0 %v1363
        %1376 = vmatprep.subr.mxu0 0.0
        %1377 = vmatpush1.msra.mxu0 %v1362
        %1378 = vmatprep.subr.mxu0 0.0
        %1379 = vmatpush1.msra.mxu0 %v1361
        %1380 = vmatprep.subr.mxu0 0.0
        %1381 = vmatpush1.msra.mxu0 %v1360
        %1382 = vmatprep.subr.mxu0 0.0
        %1383 = vmatpush1.msra.mxu0 %v1359
        %1384 = vmatprep.subr.mxu0 0.0
        %1385 = vmatpush1.msra.mxu0 %v1358
        %1386 = vmatprep.subr.mxu0 0.0
        %1387 = vmatpush1.msra.mxu0 %v1357
        %1388 = vmatprep.subr.mxu0 0.0
        %1389 = vmatpush1.msra.mxu0 %v1356
        %1390 = vmatprep.subr.mxu0 0.0
        %1391 = vmatpush1.msra.mxu0 %v1355
        %1392 = vmatprep.subr.mxu0 0.0
        %1393 = vmatpush1.msra.mxu0 %v1354
        %1394 = vmatprep.subr.mxu0 0.0
        %1395 = vmatpush1.msra.mxu0 %v1353
        %1396 = vmatprep.subr.mxu0 0.0
        %1397 = vmatpush1.msra.mxu0 %v1352
        %1398 = vmatprep.subr.mxu0 0.0
        %1399 = vmatpush1.msra.mxu0 %v1351
        %1400 = vmatprep.subr.mxu0 0.0
        %1401 = vmatpush1.msra.mxu0 %v1350
        %1402 = vmatprep.subr.mxu0 0.0
        %1403 = vmatpush1.msra.mxu0 %v1349
        %1404 = vmatprep.subr.mxu0 0.0
        %1405 = vmatpush2.msra.mxu0 0.0
        %1406 = vmatprep.subr.mxu0 0.0
        %1407 = vmatpush2.msra.mxu0 0.0
        %1408 = vmatprep.subr.mxu0 0.0
        %1409 = vmatpush2.msra.mxu0 0.0
        %1410 = vmatprep.subr.mxu0 0.0
        %1411 = vmatpush2.msra.mxu0 0.0
        %1412 = vmatprep.subr.mxu0 0.0
        %1413 = vmatpush2.msra.mxu0 0.0
        %1414 = vmatprep.subr.mxu0 0.0
        %1415 = vmatpush2.msra.mxu0 0.0
        %1416 = vmatprep.subr.mxu0 0.0
        %1417 = vmatpush2.msra.mxu0 0.0
        %1418 = vmatprep.subr.mxu0 0.0
        %1419 = vmatpush2.msra.mxu0 0.0
        %1420 = vmatprep.subr.mxu0 0.0
        %1421 = vmatpush2.msra.mxu0 0.0
        %1422 = vmatprep.subr.mxu0 0.0
        %1423 = vmatpush2.msra.mxu0 0.0
        %1424 = vmatprep.subr.mxu0 0.0
        %1425 = vmatpush2.msra.mxu0 0.0
        %1426 = vmatprep.subr.mxu0 0.0
        %1427 = vmatpush2.msra.mxu0 0.0
        %1428 = vmatprep.subr.mxu0 0.0
        %1429 = vmatpush2.msra.mxu0 0.0
        %1430 = vmatprep.subr.mxu0 0.0
        %1431 = vmatpush2.msra.mxu0 0.0
        %1432 = vmatprep.subr.mxu0 0.0
        %1433 = vmatpush2.msra.mxu0 0.0
        %1434 = vmatprep.subr.mxu0 0.0
        %1435 = vmatpush2.msra.mxu0 0.0
        %1436 = vmatprep.mubr.f32.mxu0 0.0
        %1437 = vmatmul.mubr.f32.gmra.mxu0 %v1333
        %v1438 = vpop.f32.mrf.mxu0
        %v1439 = vadd.f32 %v1370, %v1438
        %v1440 = vpop.f32.mrf.mxu0
        %1441 = vmatprep.mubr.f32.mxu0 0.0
        %1442 = vmatmul.mubr.f32.gmra.mxu0 %v1334
        %v1443 = vpop.f32.mrf.mxu0
        %v1444 = vadd.f32 %v1370, %v1443
        %v1445 = vpop.f32.mrf.mxu0
        %1446 = vmatprep.mubr.f32.mxu0 0.0
        %1447 = vmatmul.mubr.f32.gmra.mxu0 %v1335
        %v1448 = vpop.f32.mrf.mxu0
        %v1449 = vadd.f32 %v1370, %v1448
        %v1450 = vpop.f32.mrf.mxu0
        %1451 = vmatprep.mubr.f32.mxu0 0.0
        %1452 = vmatmul.mubr.f32.gmra.mxu0 %v1336
        %v1453 = vpop.f32.mrf.mxu0
        %v1454 = vadd.f32 %v1370, %v1453
        %v1455 = vpop.f32.mrf.mxu0
        %1456 = vmatprep.mubr.f32.mxu0 0.0
        %1457 = vmatmul.mubr.f32.gmra.mxu0 %v1337
        %v1458 = vpop.f32.mrf.mxu0
        %v1459 = vadd.f32 %v1370, %v1458
        %v1460 = vpop.f32.mrf.mxu0
        %1461 = vmatprep.mubr.f32.mxu0 0.0
        %1462 = vmatmul.mubr.f32.gmra.mxu0 %v1338
        %v1463 = vpop.f32.mrf.mxu0
        %v1464 = vadd.f32 %v1370, %v1463
        %v1465 = vpop.f32.mrf.mxu0
        %1466 = vmatprep.mubr.f32.mxu0 0.0
        %1467 = vmatmul.mubr.f32.gmra.mxu0 %v1339
        %v1468 = vpop.f32.mrf.mxu0
        %v1469 = vadd.f32 %v1370, %v1468
        %v1470 = vpop.f32.mrf.mxu0
        %1471 = vmatprep.mubr.f32.mxu0 0.0
        %1472 = vmatmul.mubr.f32.gmra.mxu0 %v1340
        %v1473 = vpop.f32.mrf.mxu0
        %v1474 = vadd.f32 %v1370, %v1473
        %v1475 = vpop.f32.mrf.mxu0
        %1476 = vmatprep.mubr.f32.mxu0 0.0
        %1477 = vmatmul.mubr.f32.gmra.mxu0 %v1341
        %v1478 = vpop.f32.mrf.mxu0
        %v1479 = vadd.f32 %v1370, %v1478
        %v1480 = vpop.f32.mrf.mxu0
        %1481 = vmatprep.mubr.f32.mxu0 0.0
        %1482 = vmatmul.mubr.f32.gmra.mxu0 %v1342
        %v1483 = vpop.f32.mrf.mxu0
        %v1484 = vadd.f32 %v1370, %v1483
        %v1485 = vpop.f32.mrf.mxu0
        %1486 = vmatprep.mubr.f32.mxu0 0.0
        %1487 = vmatmul.mubr.f32.gmra.mxu0 %v1343
        %v1488 = vpop.f32.mrf.mxu0
        %v1489 = vadd.f32 %v1370, %v1488
        %v1490 = vpop.f32.mrf.mxu0
        %1491 = vmatprep.mubr.f32.mxu0 0.0
        %1492 = vmatmul.mubr.f32.gmra.mxu0 %v1344
        %v1493 = vpop.f32.mrf.mxu0
        %v1494 = vadd.f32 %v1370, %v1493
        %v1495 = vpop.f32.mrf.mxu0
        %1496 = vmatprep.mubr.f32.mxu0 0.0
        %1497 = vmatmul.mubr.f32.gmra.mxu0 %v1345
        %v1498 = vpop.f32.mrf.mxu0
        %v1499 = vadd.f32 %v1370, %v1498
        %v1500 = vpop.f32.mrf.mxu0
        %1501 = vmatprep.mubr.f32.mxu0 0.0
        %1502 = vmatmul.mubr.f32.gmra.mxu0 %v1346
        %v1503 = vpop.f32.mrf.mxu0
        %v1504 = vadd.f32 %v1370, %v1503
        %v1505 = vpop.f32.mrf.mxu0
        %1506 = vmatprep.mubr.f32.mxu0 0.0
        %1507 = vmatmul.mubr.f32.gmra.mxu0 %v1347
        %v1508 = vpop.f32.mrf.mxu0
        %v1509 = vadd.f32 %v1370, %v1508
        %v1510 = vpop.f32.mrf.mxu0
        %1511 = vmatprep.mubr.f32.mxu0 0.0
        %1512 = vmatmul.mubr.f32.gmra.mxu0 %v1348
        %v1513 = vpop.f32.mrf.mxu0
        %v1514 = vadd.f32 %v1370, %v1513
        %v1515 = vpop.f32.mrf.mxu0
        %1516 = vdwg.mxu0
        %v1517 = vld [vmem:[#allocation3] sm:$0xff]
        %v1518 = vld [vmem:[#allocation3 + $0x8] sm:$0xff]
        %v1519 = vld [vmem:[#allocation3 + $0x10] sm:$0xff]
        %v1520 = vld [vmem:[#allocation3 + $0x18] sm:$0xff]
        %v1521 = vld [vmem:[#allocation3 + $0x20] sm:$0xff]
        %v1522 = vld [vmem:[#allocation3 + $0x28] sm:$0xff]
        %v1523 = vld [vmem:[#allocation3 + $0x30] sm:$0xff]
        %v1524 = vld [vmem:[#allocation3 + $0x38] sm:$0xff]
        %v1525 = vld [vmem:[#allocation3 + $0x40] sm:$0xff]
        %v1526 = vld [vmem:[#allocation3 + $0x48] sm:$0xff]
        %v1527 = vld [vmem:[#allocation3 + $0x50] sm:$0xff]
        %v1528 = vld [vmem:[#allocation3 + $0x58] sm:$0xff]
        %v1529 = vld [vmem:[#allocation3 + $0x60] sm:$0xff]
        %v1530 = vld [vmem:[#allocation3 + $0x68] sm:$0xff]
        %v1531 = vld [vmem:[#allocation3 + $0x70] sm:$0xff]
        %v1532 = vld [vmem:[#allocation3 + $0x78] sm:$0xff]
        %v1533 = vadd.f32 %v1517, %v1439
        %v1534 = vadd.f32 %v1518, %v1444
        %v1535 = vadd.f32 %v1519, %v1449
        %v1536 = vadd.f32 %v1520, %v1454
        %v1537 = vadd.f32 %v1521, %v1459
        %v1538 = vadd.f32 %v1522, %v1464
        %v1539 = vadd.f32 %v1523, %v1469
        %v1540 = vadd.f32 %v1524, %v1474
        %v1541 = vadd.f32 %v1525, %v1479
        %v1542 = vadd.f32 %v1526, %v1484
        %v1543 = vadd.f32 %v1527, %v1489
        %v1544 = vadd.f32 %v1528, %v1494
        %v1545 = vadd.f32 %v1529, %v1499
        %v1546 = vadd.f32 %v1530, %v1504
        %v1547 = vadd.f32 %v1531, %v1509
        %v1548 = vadd.f32 %v1532, %v1514
        %1549 = vst [vmem:[#allocation3] sm:$0xff] %v1533
        %1550 = vst [vmem:[#allocation3 + $0x8] sm:$0xff] %v1534
        %1551 = vst [vmem:[#allocation3 + $0x10] sm:$0xff] %v1535
        %1552 = vst [vmem:[#allocation3 + $0x18] sm:$0xff] %v1536
        %1553 = vst [vmem:[#allocation3 + $0x20] sm:$0xff] %v1537
        %1554 = vst [vmem:[#allocation3 + $0x28] sm:$0xff] %v1538
        %1555 = vst [vmem:[#allocation3 + $0x30] sm:$0xff] %v1539
        %1556 = vst [vmem:[#allocation3 + $0x38] sm:$0xff] %v1540
        %1557 = vst [vmem:[#allocation3 + $0x40] sm:$0xff] %v1541
        %1558 = vst [vmem:[#allocation3 + $0x48] sm:$0xff] %v1542
        %1559 = vst [vmem:[#allocation3 + $0x50] sm:$0xff] %v1543
        %1560 = vst [vmem:[#allocation3 + $0x58] sm:$0xff] %v1544
        %1561 = vst [vmem:[#allocation3 + $0x60] sm:$0xff] %v1545
        %1562 = vst [vmem:[#allocation3 + $0x68] sm:$0xff] %v1546
        %1563 = vst [vmem:[#allocation3 + $0x70] sm:$0xff] %v1547
        %1564 = vst [vmem:[#allocation3 + $0x78] sm:$0xff] %v1548
        %v1565 = vld [vmem:[%s477] sm:$0xff]
        %v1566 = vld [vmem:[%s477 + $0x8] sm:$0xff]
        %v1567 = vld [vmem:[%s477 + $0x10] sm:$0xff]
        %v1568 = vld [vmem:[%s477 + $0x18] sm:$0xff]
        %v1569 = vld [vmem:[%s477 + $0x20] sm:$0xff]
        %v1570 = vld [vmem:[%s477 + $0x28] sm:$0xff]
        %v1571 = vld [vmem:[%s477 + $0x30] sm:$0xff]
        %v1572 = vld [vmem:[%s477 + $0x38] sm:$0xff]
        %v1573 = vld [vmem:[%s477 + $0x40] sm:$0xff]
        %v1574 = vld [vmem:[%s477 + $0x48] sm:$0xff]
        %v1575 = vld [vmem:[%s477 + $0x50] sm:$0xff]
        %v1576 = vld [vmem:[%s477 + $0x58] sm:$0xff]
        %v1577 = vld [vmem:[%s477 + $0x60] sm:$0xff]
        %v1578 = vld [vmem:[%s477 + $0x68] sm:$0xff]
        %v1579 = vld [vmem:[%s477 + $0x70] sm:$0xff]
        %v1580 = vld [vmem:[%s477 + $0x78] sm:$0xff]
        %v1581 = vld [vmem:[%s485] sm:$0x1]
        %v1583 = vlaneseq
        %v1584 = vshrl.u32 %v1583, 7
        %v1585 = vsub.s32 0, %v1584
        %v1586 = vrot.slane %v1581, %v1585
        %1588 = vmatprep.subr.mxu0 0.0
        %1589 = vmatpush1.msra.mxu0 %v1580
        %1590 = vmatprep.subr.mxu0 0.0
        %1591 = vmatpush1.msra.mxu0 %v1579
        %1592 = vmatprep.subr.mxu0 0.0
        %1593 = vmatpush1.msra.mxu0 %v1578
        %1594 = vmatprep.subr.mxu0 0.0
        %1595 = vmatpush1.msra.mxu0 %v1577
        %1596 = vmatprep.subr.mxu0 0.0
        %1597 = vmatpush1.msra.mxu0 %v1576
        %1598 = vmatprep.subr.mxu0 0.0
        %1599 = vmatpush1.msra.mxu0 %v1575
        %1600 = vmatprep.subr.mxu0 0.0
        %1601 = vmatpush1.msra.mxu0 %v1574
        %1602 = vmatprep.subr.mxu0 0.0
        %1603 = vmatpush1.msra.mxu0 %v1573
        %1604 = vmatprep.subr.mxu0 0.0
        %1605 = vmatpush1.msra.mxu0 %v1572
        %1606 = vmatprep.subr.mxu0 0.0
        %1607 = vmatpush1.msra.mxu0 %v1571
        %1608 = vmatprep.subr.mxu0 0.0
        %1609 = vmatpush1.msra.mxu0 %v1570
        %1610 = vmatprep.subr.mxu0 0.0
        %1611 = vmatpush1.msra.mxu0 %v1569
        %1612 = vmatprep.subr.mxu0 0.0
        %1613 = vmatpush1.msra.mxu0 %v1568
        %1614 = vmatprep.subr.mxu0 0.0
        %1615 = vmatpush1.msra.mxu0 %v1567
        %1616 = vmatprep.subr.mxu0 0.0
        %1617 = vmatpush1.msra.mxu0 %v1566
        %1618 = vmatprep.subr.mxu0 0.0
        %1619 = vmatpush1.msra.mxu0 %v1565
        %1620 = vmatprep.subr.mxu0 0.0
        %1621 = vmatpush2.msra.mxu0 0.0
        %1622 = vmatprep.subr.mxu0 0.0
        %1623 = vmatpush2.msra.mxu0 0.0
        %1624 = vmatprep.subr.mxu0 0.0
        %1625 = vmatpush2.msra.mxu0 0.0
        %1626 = vmatprep.subr.mxu0 0.0
        %1627 = vmatpush2.msra.mxu0 0.0
        %1628 = vmatprep.subr.mxu0 0.0
        %1629 = vmatpush2.msra.mxu0 0.0
        %1630 = vmatprep.subr.mxu0 0.0
        %1631 = vmatpush2.msra.mxu0 0.0
        %1632 = vmatprep.subr.mxu0 0.0
        %1633 = vmatpush2.msra.mxu0 0.0
        %1634 = vmatprep.subr.mxu0 0.0
        %1635 = vmatpush2.msra.mxu0 0.0
        %1636 = vmatprep.subr.mxu0 0.0
        %1637 = vmatpush2.msra.mxu0 0.0
        %1638 = vmatprep.subr.mxu0 0.0
        %1639 = vmatpush2.msra.mxu0 0.0
        %1640 = vmatprep.subr.mxu0 0.0
        %1641 = vmatpush2.msra.mxu0 0.0
        %1642 = vmatprep.subr.mxu0 0.0
        %1643 = vmatpush2.msra.mxu0 0.0
        %1644 = vmatprep.subr.mxu0 0.0
        %1645 = vmatpush2.msra.mxu0 0.0
        %1646 = vmatprep.subr.mxu0 0.0
        %1647 = vmatpush2.msra.mxu0 0.0
        %1648 = vmatprep.subr.mxu0 0.0
        %1649 = vmatpush2.msra.mxu0 0.0
        %1650 = vmatprep.subr.mxu0 0.0
        %1651 = vmatpush2.msra.mxu0 0.0
        %1652 = vmatprep.mubr.f32.mxu0 0.0
        %1653 = vmatmul.mubr.f32.gmra.mxu0 %v1333
        %v1654 = vpop.f32.mrf.mxu0
        %v1655 = vadd.f32 %v1586, %v1654
        %v1656 = vpop.f32.mrf.mxu0
        %1657 = vmatprep.mubr.f32.mxu0 0.0
        %1658 = vmatmul.mubr.f32.gmra.mxu0 %v1334
        %v1659 = vpop.f32.mrf.mxu0
        %v1660 = vadd.f32 %v1586, %v1659
        %v1661 = vpop.f32.mrf.mxu0
        %1662 = vmatprep.mubr.f32.mxu0 0.0
        %1663 = vmatmul.mubr.f32.gmra.mxu0 %v1335
        %v1664 = vpop.f32.mrf.mxu0
        %v1665 = vadd.f32 %v1586, %v1664
        %v1666 = vpop.f32.mrf.mxu0
        %1667 = vmatprep.mubr.f32.mxu0 0.0
        %1668 = vmatmul.mubr.f32.gmra.mxu0 %v1336
        %v1669 = vpop.f32.mrf.mxu0
        %v1670 = vadd.f32 %v1586, %v1669
        %v1671 = vpop.f32.mrf.mxu0
        %1672 = vmatprep.mubr.f32.mxu0 0.0
        %1673 = vmatmul.mubr.f32.gmra.mxu0 %v1337
        %v1674 = vpop.f32.mrf.mxu0
        %v1675 = vadd.f32 %v1586, %v1674
        %v1676 = vpop.f32.mrf.mxu0
        %1677 = vmatprep.mubr.f32.mxu0 0.0
        %1678 = vmatmul.mubr.f32.gmra.mxu0 %v1338
        %v1679 = vpop.f32.mrf.mxu0
        %v1680 = vadd.f32 %v1586, %v1679
        %v1681 = vpop.f32.mrf.mxu0
        %1682 = vmatprep.mubr.f32.mxu0 0.0
        %1683 = vmatmul.mubr.f32.gmra.mxu0 %v1339
        %v1684 = vpop.f32.mrf.mxu0
        %v1685 = vadd.f32 %v1586, %v1684
        %v1686 = vpop.f32.mrf.mxu0
        %1687 = vmatprep.mubr.f32.mxu0 0.0
        %1688 = vmatmul.mubr.f32.gmra.mxu0 %v1340
        %v1689 = vpop.f32.mrf.mxu0
        %v1690 = vadd.f32 %v1586, %v1689
        %v1691 = vpop.f32.mrf.mxu0
        %1692 = vmatprep.mubr.f32.mxu0 0.0
        %1693 = vmatmul.mubr.f32.gmra.mxu0 %v1341
        %v1694 = vpop.f32.mrf.mxu0
        %v1695 = vadd.f32 %v1586, %v1694
        %v1696 = vpop.f32.mrf.mxu0
        %1697 = vmatprep.mubr.f32.mxu0 0.0
        %1698 = vmatmul.mubr.f32.gmra.mxu0 %v1342
        %v1699 = vpop.f32.mrf.mxu0
        %v1700 = vadd.f32 %v1586, %v1699
        %v1701 = vpop.f32.mrf.mxu0
        %1702 = vmatprep.mubr.f32.mxu0 0.0
        %1703 = vmatmul.mubr.f32.gmra.mxu0 %v1343
        %v1704 = vpop.f32.mrf.mxu0
        %v1705 = vadd.f32 %v1586, %v1704
        %v1706 = vpop.f32.mrf.mxu0
        %1707 = vmatprep.mubr.f32.mxu0 0.0
        %1708 = vmatmul.mubr.f32.gmra.mxu0 %v1344
        %v1709 = vpop.f32.mrf.mxu0
        %v1710 = vadd.f32 %v1586, %v1709
        %v1711 = vpop.f32.mrf.mxu0
        %1712 = vmatprep.mubr.f32.mxu0 0.0
        %1713 = vmatmul.mubr.f32.gmra.mxu0 %v1345
        %v1714 = vpop.f32.mrf.mxu0
        %v1715 = vadd.f32 %v1586, %v1714
        %v1716 = vpop.f32.mrf.mxu0
        %1717 = vmatprep.mubr.f32.mxu0 0.0
        %1718 = vmatmul.mubr.f32.gmra.mxu0 %v1346
        %v1719 = vpop.f32.mrf.mxu0
        %v1720 = vadd.f32 %v1586, %v1719
        %v1721 = vpop.f32.mrf.mxu0
        %1722 = vmatprep.mubr.f32.mxu0 0.0
        %1723 = vmatmul.mubr.f32.gmra.mxu0 %v1347
        %v1724 = vpop.f32.mrf.mxu0
        %v1725 = vadd.f32 %v1586, %v1724
        %v1726 = vpop.f32.mrf.mxu0
        %1727 = vmatprep.mubr.f32.mxu0 0.0
        %1728 = vmatmul.mubr.f32.gmra.mxu0 %v1348
        %v1729 = vpop.f32.mrf.mxu0
        %v1730 = vadd.f32 %v1586, %v1729
        %v1731 = vpop.f32.mrf.mxu0
        %1732 = vdwg.mxu0
        %v1733 = vadd.f32 %v1655, %v755
        %v1734 = vadd.f32 %v1660, %v756
        %v1735 = vadd.f32 %v1665, %v757
        %v1736 = vadd.f32 %v1670, %v758
        %v1737 = vadd.f32 %v1675, %v759
        %v1738 = vadd.f32 %v1680, %v760
        %v1739 = vadd.f32 %v1685, %v761
        %v1740 = vadd.f32 %v1690, %v762
        %v1741 = vadd.f32 %v1695, %v763
        %v1742 = vadd.f32 %v1700, %v764
        %v1743 = vadd.f32 %v1705, %v765
        %v1744 = vadd.f32 %v1710, %v766
        %v1745 = vadd.f32 %v1715, %v767
        %v1746 = vadd.f32 %v1720, %v768
        %v1747 = vadd.f32 %v1725, %v769
        %v1748 = vadd.f32 %v1730, %v770
        %1749 = vst [vmem:[#allocation2 + $0x4] sm:$0xff] %v1733
        %1750 = vst [vmem:[#allocation2 + $0xc] sm:$0xff] %v1734
        %1751 = vst [vmem:[#allocation2 + $0x14] sm:$0xff] %v1735
        %1752 = vst [vmem:[#allocation2 + $0x1c] sm:$0xff] %v1736
        %1753 = vst [vmem:[#allocation2 + $0x24] sm:$0xff] %v1737
        %1754 = vst [vmem:[#allocation2 + $0x2c] sm:$0xff] %v1738
        %1755 = vst [vmem:[#allocation2 + $0x34] sm:$0xff] %v1739
        %1756 = vst [vmem:[#allocation2 + $0x3c] sm:$0xff] %v1740
        %1757 = vst [vmem:[#allocation2 + $0x4c] sm:$0xff] %v1741
        %1758 = vst [vmem:[#allocation2 + $0x54] sm:$0xff] %v1742
        %1759 = vst [vmem:[#allocation2 + $0x5c] sm:$0xff] %v1743
        %1760 = vst [vmem:[#allocation2 + $0x64] sm:$0xff] %v1744
        %1761 = vst [vmem:[#allocation2 + $0x6c] sm:$0xff] %v1745
        %1762 = vst [vmem:[#allocation2 + $0x74] sm:$0xff] %v1746
        %1763 = vst [vmem:[#allocation2 + $0x7c] sm:$0xff] %v1747
        %1764 = vst [vmem:[#allocation2 + $0x84] sm:$0xff] %v1748
        %p1765 = scmp.eq.s32.totalorder %s28, 2
        // Predicated region
        $region93: #{tpu_custom_call.1} parent=55 // pred_check
          %p1766 = pneg %p1765
        $region94: #{tpu_custom_call.1} parent=55 // pred_check_branch
          %1768 = sbr.rel (%p1766) target = $region96
        $region95: #{tpu_custom_call.1} parent=55 // pred_region
          %v1769 = vld [vmem:[#allocation3] sm:$0xff]
          %v1770 = vld [vmem:[#allocation3 + $0x8] sm:$0xff]
          %v1771 = vld [vmem:[#allocation3 + $0x10] sm:$0xff]
          %v1772 = vld [vmem:[#allocation3 + $0x18] sm:$0xff]
          %v1773 = vld [vmem:[#allocation3 + $0x20] sm:$0xff]
          %v1774 = vld [vmem:[#allocation3 + $0x28] sm:$0xff]
          %v1775 = vld [vmem:[#allocation3 + $0x30] sm:$0xff]
          %v1776 = vld [vmem:[#allocation3 + $0x38] sm:$0xff]
          %v1777 = vld [vmem:[#allocation3 + $0x40] sm:$0xff]
          %v1778 = vld [vmem:[#allocation3 + $0x48] sm:$0xff]
          %v1779 = vld [vmem:[#allocation3 + $0x50] sm:$0xff]
          %v1780 = vld [vmem:[#allocation3 + $0x58] sm:$0xff]
          %v1781 = vld [vmem:[#allocation3 + $0x60] sm:$0xff]
          %v1782 = vld [vmem:[#allocation3 + $0x68] sm:$0xff]
          %v1783 = vld [vmem:[#allocation3 + $0x70] sm:$0xff]
          %v1784 = vld [vmem:[#allocation3 + $0x78] sm:$0xff]
          %vm1785 = vcmp.gt.f32.partialorder %v1769, 0.0
          %vm1786 = vcmp.gt.f32.partialorder %v1770, 0.0
          %vm1787 = vcmp.gt.f32.partialorder %v1771, 0.0
          %vm1788 = vcmp.gt.f32.partialorder %v1772, 0.0
          %vm1789 = vcmp.gt.f32.partialorder %v1773, 0.0
          %vm1790 = vcmp.gt.f32.partialorder %v1774, 0.0
          %vm1791 = vcmp.gt.f32.partialorder %v1775, 0.0
          %vm1792 = vcmp.gt.f32.partialorder %v1776, 0.0
          %vm1793 = vcmp.gt.f32.partialorder %v1777, 0.0
          %vm1794 = vcmp.gt.f32.partialorder %v1778, 0.0
          %vm1795 = vcmp.gt.f32.partialorder %v1779, 0.0
          %vm1796 = vcmp.gt.f32.partialorder %v1780, 0.0
          %vm1797 = vcmp.gt.f32.partialorder %v1781, 0.0
          %vm1798 = vcmp.gt.f32.partialorder %v1782, 0.0
          %vm1799 = vcmp.gt.f32.partialorder %v1783, 0.0
          %vm1800 = vcmp.gt.f32.partialorder %v1784, 0.0
          %v1801 = vmul.f32 %v1769, 0.1
          %v1802 = vmul.f32 %v1770, 0.1
          %v1803 = vmul.f32 %v1771, 0.1
          %v1804 = vmul.f32 %v1772, 0.1
          %v1805 = vmul.f32 %v1773, 0.1
          %v1806 = vmul.f32 %v1774, 0.1
          %v1807 = vmul.f32 %v1775, 0.1
          %v1808 = vmul.f32 %v1776, 0.1
          %v1809 = vmul.f32 %v1777, 0.1
          %v1810 = vmul.f32 %v1778, 0.1
          %v1811 = vmul.f32 %v1779, 0.1
          %v1812 = vmul.f32 %v1780, 0.1
          %v1813 = vmul.f32 %v1781, 0.1
          %v1814 = vmul.f32 %v1782, 0.1
          %v1815 = vmul.f32 %v1783, 0.1
          %v1816 = vmul.f32 %v1784, 0.1
          %v1817 = vsel %vm1785, %v1769, %v1801
          %v1818 = vsel %vm1786, %v1770, %v1802
          %v1819 = vsel %vm1787, %v1771, %v1803
          %v1820 = vsel %vm1788, %v1772, %v1804
          %v1821 = vsel %vm1789, %v1773, %v1805
          %v1822 = vsel %vm1790, %v1774, %v1806
          %v1823 = vsel %vm1791, %v1775, %v1807
          %v1824 = vsel %vm1792, %v1776, %v1808
          %v1825 = vsel %vm1793, %v1777, %v1809
          %v1826 = vsel %vm1794, %v1778, %v1810
          %v1827 = vsel %vm1795, %v1779, %v1811
          %v1828 = vsel %vm1796, %v1780, %v1812
          %v1829 = vsel %vm1797, %v1781, %v1813
          %v1830 = vsel %vm1798, %v1782, %v1814
          %v1831 = vsel %vm1799, %v1783, %v1815
          %v1832 = vsel %vm1800, %v1784, %v1816
          %1833 = vst [vmem:[#allocation17] sm:$0xff] %v1817
          %1834 = vst [vmem:[#allocation17 + $0x8] sm:$0xff] %v1818
          %1835 = vst [vmem:[#allocation17 + $0x10] sm:$0xff] %v1819
          %1836 = vst [vmem:[#allocation17 + $0x18] sm:$0xff] %v1820
          %1837 = vst [vmem:[#allocation17 + $0x20] sm:$0xff] %v1821
          %1838 = vst [vmem:[#allocation17 + $0x28] sm:$0xff] %v1822
          %1839 = vst [vmem:[#allocation17 + $0x30] sm:$0xff] %v1823
          %1840 = vst [vmem:[#allocation17 + $0x38] sm:$0xff] %v1824
          %1841 = vst [vmem:[#allocation17 + $0x40] sm:$0xff] %v1825
          %1842 = vst [vmem:[#allocation17 + $0x48] sm:$0xff] %v1826
          %1843 = vst [vmem:[#allocation17 + $0x50] sm:$0xff] %v1827
          %1844 = vst [vmem:[#allocation17 + $0x58] sm:$0xff] %v1828
          %1845 = vst [vmem:[#allocation17 + $0x60] sm:$0xff] %v1829
          %1846 = vst [vmem:[#allocation17 + $0x68] sm:$0xff] %v1830
          %1847 = vst [vmem:[#allocation17 + $0x70] sm:$0xff] %v1831
          %1848 = vst [vmem:[#allocation17 + $0x78] sm:$0xff] %v1832
        $region96: #{tpu_custom_call.1} parent=55 // pred_fallthru
          _
        // Predicated region
        $region97: #{tpu_custom_call.1} parent=55 // pred_check
          %p1849 = pneg %p260
        $region98: #{tpu_custom_call.1} parent=55 // pred_check_branch
          %1851 = sbr.rel (%p1849) target = $region100
        $region99: #{tpu_custom_call.1} parent=55 // pred_region
          %s1853 = ssub.s32 2048, 2048
          %1854 = vsyncadd [#allocation8], %s1853
          %s1855 = sshll.u32 [#allocation17], 4
          %s1856 = int_to_ptr.vmem [resolvable:$true] %s1855
          %1861 = dma.vmem_to_hbm [thread:$0]  %s1856, 2048, %s10, [#allocation8], 128, 128, 8
        $region100: #{tpu_custom_call.1} parent=55 // pred_fallthru
          _
        // Predicated region
        $region101: #{tpu_custom_call.1} parent=55 // pred_check
          %p1862 = pneg %p260
        $region102: #{tpu_custom_call.1} parent=55 // pred_check_branch
          %1864 = sbr.rel (%p1862) target = $region104
        $region103: #{tpu_custom_call.1} parent=55 // pred_region
          %1865 = dma.done [#allocation8], 2048
        $region104: #{tpu_custom_call.1} parent=55 // pred_fallthru
          _
      $region56: #{tpu_custom_call.1} parent=5 // pred_fallthru
        _
      %p1866 = scmp.le.s32.totalorder 2, %s23
      // Predicated region
      $region105: #{tpu_custom_call.1} parent=5 // pred_check
        %p1867 = pneg %p1866
      $region106: #{tpu_custom_call.1} parent=5 // pred_check_branch
        %1869 = sbr.rel (%p1867) target = $region108
      $region107: #{tpu_custom_call.1} parent=5 // pred_region
        %s1870 = ssub.s32 %s23, 2
      $region108: #{tpu_custom_call.1} parent=5 // pred_fallthru
        _
    $region6: #{tpu_custom_call.1} parent=1 // loop_footer
      %s27 = sadd.s32 1, %s23
    $region7: #{tpu_custom_call.1} parent=1 // loop_footer_branch
      %22 = sbr.rel target = $region3
    $region8: #{tpu_custom_call.1} parent=1 // loop_exit
      _
    %1871 = vsyncpa [#allocation7], 1
    %s1872 = scalar_lea.sflag [#allocation7], 1
    %1873 = vsyncpa %s1872, 1
    %1874 = vsyncpa [#allocation10], 1
    %1875 = vsyncpa [#allocation8], 1
    %s1876 = scalar_lea.sflag [#allocation8], 1
    %1877 = vsyncpa %s1876, 1

</llo_original>
